<compile_context>
chip_gen: v7x
topology: tpu7x:2x2x1
jax: 0.10.0
libtpu: 0.0.40
codegen_flags: <defaults>
</compile_context>

<pallas_src>
import functools
import numpy as np
import jax
import jax.numpy as jnp
from jax.experimental import pallas as pl

PATCH = 4          # patch size of the synthetic image encoder
EMBED_DIM = 32     # prompt / image embedding dim
DU = 8             # upscaled-embedding channel dim (mask head)
PP = PATCH * PATCH


# --------------------------- Pallas kernel -----------------------------------

def _make_medsam_kernel(B, S, T, D, pe_row0, offs):
    """Fully fused: image encoder + prompt-conditioned mask decoder +
    sigmoid + bilinear resize + (x > 0.5) threshold.

    All operands are VMEM resident.  Matmuls feed the MXU in bf16 with f32
    accumulation; elementwise math (gelu / exp / sigmoid) stays f32; the
    0/1 selector matmuls and the final resize matmul stay f32 so the hard
    threshold is not perturbed."""
    scale = 1.0 / float(np.sqrt(D))

    def mm16(a, b):
        return jnp.dot(a.astype(jnp.bfloat16), b.astype(jnp.bfloat16),
                       preferred_element_type=jnp.float32)

    def mm32(a, b):
        return jnp.dot(a, b, preferred_element_type=jnp.float32)

    def kernel(patches_ref, tokpe_ref, slab_ref, kmat_ref, out_ref):
        def rd(name):
            r0, r, c = offs[name]
            return slab_ref[r0:r0 + r, 0:c]

        # ---- image encoder: patch embed + MLP (epilogues fused) -------------
        # jax.nn.gelu defaults to the tanh approximation; PyTorch nn.GELU uses
        # exact erf -- pass approximate=False if bit-matching matters.
        x = mm16(patches_ref[...], rd("w_patch")) + rd("b_patch")
        x = jax.nn.gelu(x)
        img = mm16(x, rd("w_enc")) + rd("b_enc")                 # (B*S, D)

        # ---- dense prompt embedding (no-mask) -> decoder source -------------
        src = img + rd("no_mask")                                # (B*S, D)

        # ---- fused q/k/v projections (two dots, no in-kernel concat) --------
        wqkv = rd("wqkv")                                        # (D, 3D)
        proj_tp = mm16(tokpe_ref[...], wqkv)                     # (pad+B*S, 3D)
        proj_sr = mm16(src, wqkv)                                # (B*S, 3D)
        q = proj_tp[0:B * T, 0:D]                                # (B*T, D)
        pe_k = proj_tp[pe_row0:pe_row0 + B * S, D:2 * D]         # (B*S, D)
        k_all = proj_sr[:, D:2 * D] + pe_k                       # (B*S, D)
        v_all = proj_sr[:, 2 * D:3 * D]                          # (B*S, D)

        # ---- block-masked batched cross-attention (tokens -> image) ---------
        s = jax.lax.dot_general(
            q.astype(jnp.bfloat16), k_all.astype(jnp.bfloat16),
            (((1,), (1,)), ((), ())),
            preferred_element_type=jnp.float32) * scale          # (B*T, B*S)
        s = s + rd("attn_bias")                                  # -1e9 cross-batch
        s = s - jnp.max(s, axis=-1, keepdims=True)
        p = jnp.exp(s)
        p = p * pl.reciprocal(jnp.sum(p, axis=-1, keepdims=True), approx=True)
        attn = mm16(p, v_all)                                    # (B*T, D)
        tok_new = tokpe_ref[0:B * T, :] + mm16(attn, rd("wo"))   # residual

        # ---- hypernetwork on the mask token (exact 0/1 row-select dot) ------
        mask_tok = mm32(rd("sel_tok"), tok_new)                  # (B, D)
        h = jnp.maximum(mm16(mask_tok, rd("w_h1")) + rd("b_h1"), 0.0)
        hyper_w = mm16(h, rd("w_h2w")) + rd("b_h2w")             # (B, DU*PP) lane-expanded
        hyp_rows = mm32(rd("row_sel"), hyper_w)                  # (B*S, DU*PP)

        # ---- upscaled embedding + DU contraction (VPU mul + selector dot) ---
        up = jax.nn.gelu(mm16(src, rd("w_up")) + rd("b_up"))     # (B*S, DU*PP)
        low = mm32(up * hyp_rows, rd("du_sel"))                  # (B*S, PP) logits

        # ---- sigmoid -> exact relayout to (B, S*PP) -> resize -> threshold --
        sig = jax.nn.sigmoid(low)                                # (B*S, PP)
        spread = mm32(sig, rd("tile_mat"))                       # (B*S, S*PP)
        sig_b = mm32(rd("sel_b"), spread * rd("m_mask"))         # (B, S*PP)
        y = mm32(sig_b, kmat_ref[...])                           # (B, HWpad) f32
        out_ref[...] = (y > 0.5).astype(jnp.float32)

    return kernel


# ------------------------------- glue ----------------------------------------

def bilinear_matrix(out_size, in_size):
    """Dense 1-D interpolation matrix matching
    F.interpolate(mode='bilinear', align_corners=False); source index clamped
    at BOTH ends."""
    scale = in_size / out_size
    i = np.arange(out_size, dtype=np.float64)
    src = (i + 0.5) * scale - 0.5
    src = np.clip(src, 0.0, in_size - 1)
    i0 = np.floor(src).astype(np.int64)
    i1 = np.minimum(i0 + 1, in_size - 1)
    lam = src - i0
    W = np.zeros((out_size, in_size), dtype=np.float64)
    W[np.arange(out_size), i0] += 1.0 - lam
    W[np.arange(out_size), i1] += lam
    return W


def _resize_matrix(height, width, Hg, Wg, hw_pad):
    """Pre-compose the (Hg*Wg*P*P) -> H*W bilinear map with the (hg,wg,py,px)
    column layout produced by the kernel; columns zero-padded to hw_pad so the
    output store is 128-lane dense."""
    rw = bilinear_matrix(height, Hg * PATCH).reshape(height, Hg, PATCH)
    cw = bilinear_matrix(width, Wg * PATCH).reshape(width, Wg, PATCH)
    k6 = np.einsum("ihy,jwx->ijhwyx", rw, cw)          # (H,W,Hg,Wg,P,P)
    k = k6.reshape(height * width, Hg * Wg * PATCH * PATCH).T   # (S*PP, H*W)
    kp = np.zeros((k.shape[0], hw_pad), dtype=np.float64)
    kp[:, :height * width] = k
    return jnp.asarray(np.ascontiguousarray(kp), dtype=jnp.float32)


def _structural_constants(B, S, T):
    """Host-built 0/1 selector / mask matrices (shapes are static)."""
    blk = np.kron(np.eye(B), np.ones((T, S)))                 # (B*T, B*S)
    attn_bias = (blk - 1.0) * 1e9                             # 0 same-batch, -1e9 cross
    sel_tok = np.zeros((B, B * T))
    sel_tok[np.arange(B), np.arange(B) * T] = 1.0             # pick mask token row
    row_sel = np.repeat(np.eye(B), S, axis=0)                 # (B*S, B)
    sel_b = row_sel.T.copy()                                  # (B, B*S)
    du_sel = np.tile(np.eye(PP), (DU, 1))                     # (DU*PP, PP)
    tile_mat = np.tile(np.eye(PP), (1, S))                    # (PP, S*PP)
    m_mask = np.tile(np.repeat(np.eye(S), PP, axis=1), (B, 1))  # (B*S, S*PP)
    return dict(attn_bias=attn_bias, sel_tok=sel_tok, row_sel=row_sel,
                sel_b=sel_b, du_sel=du_sel, tile_mat=tile_mat, m_mask=m_mask)


def _pack_slab(entries):
    """Pack all small weights / biases / structural constants into one
    contiguous (rows, width) f32 slab; returns the slab and {name: (row0,
    rows, cols)} static offsets for zero-cost carving inside the kernel."""
    prepared, width = [], 0
    for name, a in entries:
        a = jnp.asarray(a, jnp.float32)
        if a.ndim == 1:
            a = a[None, :]
        prepared.append((name, a))
        width = max(width, a.shape[1])
    width = -(-width // 128) * 128
    blocks, offs, row = [], {}, 0
    for name, a in prepared:
        r, c = a.shape
        rp = -(-r // 8) * 8                                   # 8-row aligned blocks
        blk = jnp.zeros((rp, width), jnp.float32).at[:r, :c].set(a)
        offs[name] = (row, r, c)
        blocks.append(blk)
        row += rp
    return jnp.concatenate(blocks, axis=0), offs


def pe_encoding(coords, gauss):
    """SAM PositionEmbeddingRandom: coords in [0, 1], last dim = (x, y)."""
    coords = 2.0 * coords - 1.0
    coords = coords @ gauss
    coords = 2.0 * np.pi * coords
    return jnp.concatenate([jnp.sin(coords), jnp.cos(coords)], axis=-1)


def init_params(key, in_chans=3):
    D = EMBED_DIM
    keys = jax.random.split(key, 16)

    def nrm(k, shape, scale=0.1):
        return (scale * jax.random.normal(k, shape)).astype(jnp.float32)

    return {
        # image encoder
        "w_patch": nrm(keys[0], (in_chans * PATCH * PATCH, D)),
        "b_patch": nrm(keys[1], (D,)),
        "w_enc": nrm(keys[2], (D, D)),
        "b_enc": nrm(keys[3], (D,)),
        # prompt encoder (frozen in the torch module)
        "pe_gauss": jax.random.normal(keys[4], (2, D // 2)).astype(jnp.float32),
        "corner_embed": nrm(keys[5], (2, D)),
        "no_mask_embed": nrm(keys[6], (D,)),
        # mask decoder
        "mask_token": nrm(keys[7], (D,)),
        "wq": nrm(keys[8], (D, D)),
        "wk": nrm(keys[9], (D, D)),
        "wv": nrm(keys[10], (D, D)),
        "wo": nrm(keys[11], (D, D)),
        "w_h1": nrm(keys[12], (D, D)),
        "b_h1": jnp.zeros((D,), jnp.float32),
        "w_h2": nrm(keys[13], (D, DU)),
        "b_h2": jnp.zeros((DU,), jnp.float32),
        # columns ordered (du, py, px) -> 128-lane-dense upscale projection
        "w_up": nrm(keys[14], (D, DU * PATCH * PATCH)),
        "b_up": jnp.zeros((DU * PATCH * PATCH,), jnp.float32),
    }


@functools.partial(jax.jit, static_argnums=(3, 4))
def medsam_forward(params, image, boxes, height, width):
    """Mirrors MedSAM.forward: encode image, encode box prompt (frozen),
    decode low-res masks, sigmoid, bilinear-resize to (height, width),
    then MyFunction.apply == (x > 0.5).float()."""
    B, C, H_img, W_img = image.shape
    D = EMBED_DIM
    assert H_img % PATCH == 0 and W_img % PATCH == 0
    Hg, Wg = H_img // PATCH, W_img // PATCH
    S = Hg * Wg
    HW = height * width
    HWpad = -(-HW // 128) * 128                      # lane-dense padded output

    # --- boxes handling (torch.as_tensor + [:, None, :] when 2-D) -----------
    boxes = jnp.asarray(boxes, dtype=jnp.float32)
    if boxes.ndim == 2:
        boxes = boxes[:, None, :]                    # (B, 1, 4)
    # TODO(synk): the mask-prompt branch of the SAM prompt encoder (mask
    # downscaling convs) is not implemented; this path uses masks=None
    # exactly like MedSAM when self.masks is None.

    # --- im2col for the patch-embed conv -------------------------------------
    patches = image.reshape(B, C, Hg, PATCH, Wg, PATCH)
    patches = patches.transpose(0, 2, 4, 1, 3, 5).reshape(
        B * S, C * PATCH * PATCH)

    # --- frozen prompt encoder (positional encodings), plain JAX glue -------
    ys = (jnp.arange(Hg, dtype=jnp.float32) + 0.5) / Hg
    xs = (jnp.arange(Wg, dtype=jnp.float32) + 0.5) / Wg
    gy, gx = jnp.meshgrid(ys, xs, indexing="ij")
    grid_coords = jnp.stack([gx, gy], axis=-1)                    # (Hg,Wg,2)
    dense_pe = pe_encoding(grid_coords, params["pe_gauss"]).reshape(S, D)

    corners = (boxes.reshape(B, 2, 2) + 0.5) / jnp.asarray(
        [W_img, H_img], dtype=jnp.float32)
    sparse = pe_encoding(corners, params["pe_gauss"]) \
        + params["corner_embed"][None]                            # (B, 2, D)
    tokens = jnp.concatenate(
        [jnp.broadcast_to(params["mask_token"][None, None, :], (B, 1, D)),
         sparse], axis=1)                                         # (B, T, D)
    T = tokens.shape[1]
    tok2d = tokens.reshape(B * T, D)

    # host-stacked [tokens ; zero pad to 8 rows ; tiled dense PE] operand so
    # the merged qkv projection needs no in-kernel concatenation.
    pad_t = (-(B * T)) % 8
    pe_row0 = B * T + pad_t
    tokpe = jnp.concatenate(
        [tok2d, jnp.zeros((pad_t, D), jnp.float32),
         jnp.tile(dense_pe, (B, 1))], axis=0)                     # (pe_row0+B*S, D)

    # --- fold / merge weights on the host ------------------------------------
    wqkv = jnp.concatenate([params["wq"], params["wk"], params["wv"]], axis=1)
    w_h2w = jnp.repeat(params["w_h2"], PP, axis=1)                # (D, DU*PP)
    b_h2w = jnp.repeat(params["b_h2"], PP)                        # (DU*PP,)

    consts = _structural_constants(B, S, T)
    entries = [
        ("w_patch", params["w_patch"]), ("b_patch", params["b_patch"]),
        ("w_enc", params["w_enc"]), ("b_enc", params["b_enc"]),
        ("no_mask", params["no_mask_embed"]),
        ("wqkv", wqkv), ("wo", params["wo"]),
        ("w_h1", params["w_h1"]), ("b_h1", params["b_h1"]),
        ("w_h2w", w_h2w), ("b_h2w", b_h2w),
        ("w_up", params["w_up"]), ("b_up", params["b_up"]),
        ("attn_bias", consts["attn_bias"]), ("sel_tok", consts["sel_tok"]),
        ("row_sel", consts["row_sel"]), ("sel_b", consts["sel_b"]),
        ("du_sel", consts["du_sel"]), ("tile_mat", consts["tile_mat"]),
        ("m_mask", consts["m_mask"]),
    ]
    slab, offs = _pack_slab(entries)                 # ONE weight/constant DMA

    kmat = _resize_matrix(height, width, Hg, Wg, HWpad)   # (S*PP, HWpad)

    # --- single fused kernel: encoder + decoder + sigmoid/resize/threshold --
    kernel = _make_medsam_kernel(B, S, T, D, pe_row0, offs)
    out_flat = pl.pallas_call(
        kernel,
        out_shape=jax.ShapeDtypeStruct((B, HWpad), jnp.float32),
    )(patches, tokpe, slab, kmat)

    return out_flat[:, :HW].reshape(B, 1, height, width)


if __name__ == "__main__":
    key = jax.random.PRNGKey(0)
    k_img, k_par = jax.random.split(key)

    B, C, H, W = 2, 3, 16, 16
    image = jax.random.normal(k_img, (B, C, H, W), dtype=jnp.float32)
    boxes = jnp.asarray([[2.0, 3.0, 10.0, 12.0],
                         [1.0, 1.0, 14.0, 15.0]], dtype=jnp.float32)  # (B, 4)
    params = init_params(k_par, in_chans=C)

    out_h, out_w = 24, 24          # MedSAM.setBox(height, width)
    out = medsam_forward(params, image, boxes, out_h, out_w)
    out = jax.block_until_ready(out)

    assert out.shape == (B, 1, out_h, out_w)
    assert out.dtype == jnp.float32
    # binary output (MyFunction.forward == (x > 0.5).float())
    assert bool(jnp.all((out == 0.0) | (out == 1.0)))
    print("KERNEL_OK")
</pallas_src>

<mosaic_0001>
module attributes {stable_mosaic.version = 11 : i64} {
  func.func @kernel(%arg0: memref<32x48xf32, #tpu.memory_space<vmem>>, %arg1: memref<40x32xf32, #tpu.memory_space<vmem>>, %arg2: memref<520x256xf32, #tpu.memory_space<vmem>>, %arg3: memref<256x640xf32, #tpu.memory_space<vmem>>, %arg4: memref<2x640xf32, #tpu.memory_space<vmem>>) attributes {dimension_semantics = [], scalar_prefetch = 0 : i64, scratch_operands = 0 : i64, tpu.core_type = #tpu.core_type<tc>} {
    %c0 = arith.constant 0 : index
    %c0_0 = arith.constant 0 : index
    %0 = vector.load %arg0[%c0, %c0_0] : memref<32x48xf32, #tpu.memory_space<vmem>>, vector<32x48xf32>
    %c0_1 = arith.constant 0 : index
    %c0_2 = arith.constant 0 : index
    %1 = vector.load %arg2[%c0_1, %c0_2] : memref<520x256xf32, #tpu.memory_space<vmem>>, vector<48x32xf32>
    %2 = arith.truncf %0 : vector<32x48xf32> to vector<32x48xbf16>
    %3 = arith.truncf %1 : vector<48x32xf32> to vector<48x32xbf16>
    %cst = arith.constant dense<0.000000e+00> : vector<32x32xf32>
    %4 = tpu.matmul %2, %3, %cst {dimension_numbers = #tpu.dot_dimension_numbers<[1], [0], [0], [1], [0, 0, 1, 1], [], []>} : vector<32x48xbf16>, vector<48x32xbf16>, vector<32x32xf32> -> vector<32x32xf32>
    %c48 = arith.constant 48 : index
    %c0_3 = arith.constant 0 : index
    %5 = vector.load %arg2[%c48, %c0_3] : memref<520x256xf32, #tpu.memory_space<vmem>>, vector<1x32xf32>
    %6 = vector.broadcast %5 : vector<1x32xf32> to vector<32x32xf32>
    %7 = arith.addf %4, %6 : vector<32x32xf32>
    %8 = arith.mulf %7, %7 : vector<32x32xf32>
    %9 = arith.mulf %7, %8 : vector<32x32xf32>
    %cst_4 = arith.constant 4.471500e-02 : f32
    %10 = vector.broadcast %cst_4 : f32 to vector<32x32xf32>
    %11 = arith.mulf %10, %9 : vector<32x32xf32>
    %12 = arith.addf %7, %11 : vector<32x32xf32>
    %cst_5 = arith.constant 0.797884583 : f32
    %13 = vector.broadcast %cst_5 : f32 to vector<32x32xf32>
    %14 = arith.mulf %13, %12 : vector<32x32xf32>
    %15 = math.tanh %14 : vector<32x32xf32>
    %cst_6 = arith.constant 1.000000e+00 : f32
    %16 = vector.broadcast %cst_6 : f32 to vector<32x32xf32>
    %17 = arith.addf %16, %15 : vector<32x32xf32>
    %cst_7 = arith.constant 5.000000e-01 : f32
    %18 = vector.broadcast %cst_7 : f32 to vector<32x32xf32>
    %19 = arith.mulf %18, %17 : vector<32x32xf32>
    %20 = arith.mulf %7, %19 : vector<32x32xf32>
    %c56 = arith.constant 56 : index
    %c0_8 = arith.constant 0 : index
    %21 = vector.load %arg2[%c56, %c0_8] : memref<520x256xf32, #tpu.memory_space<vmem>>, vector<32x32xf32>
    %22 = arith.truncf %20 : vector<32x32xf32> to vector<32x32xbf16>
    %23 = arith.truncf %21 : vector<32x32xf32> to vector<32x32xbf16>
    %cst_9 = arith.constant dense<0.000000e+00> : vector<32x32xf32>
    %24 = tpu.matmul %22, %23, %cst_9 {dimension_numbers = #tpu.dot_dimension_numbers<[1], [0], [0], [1], [0, 0, 1, 1], [], []>} : vector<32x32xbf16>, vector<32x32xbf16>, vector<32x32xf32> -> vector<32x32xf32>
    %c88 = arith.constant 88 : index
    %c0_10 = arith.constant 0 : index
    %25 = vector.load %arg2[%c88, %c0_10] : memref<520x256xf32, #tpu.memory_space<vmem>>, vector<1x32xf32>
    %26 = vector.broadcast %25 : vector<1x32xf32> to vector<32x32xf32>
    %27 = arith.addf %24, %26 : vector<32x32xf32>
    %c96 = arith.constant 96 : index
    %c0_11 = arith.constant 0 : index
    %28 = vector.load %arg2[%c96, %c0_11] : memref<520x256xf32, #tpu.memory_space<vmem>>, vector<1x32xf32>
    %29 = vector.broadcast %28 : vector<1x32xf32> to vector<32x32xf32>
    %30 = arith.addf %27, %29 : vector<32x32xf32>
    %c104 = arith.constant 104 : index
    %c0_12 = arith.constant 0 : index
    %31 = vector.load %arg2[%c104, %c0_12] : memref<520x256xf32, #tpu.memory_space<vmem>>, vector<32x96xf32>
    %c0_13 = arith.constant 0 : index
    %c0_14 = arith.constant 0 : index
    %32 = vector.load %arg1[%c0_13, %c0_14] : memref<40x32xf32, #tpu.memory_space<vmem>>, vector<40x32xf32>
    %33 = arith.truncf %32 : vector<40x32xf32> to vector<40x32xbf16>
    %34 = arith.truncf %31 : vector<32x96xf32> to vector<32x96xbf16>
    %cst_15 = arith.constant dense<0.000000e+00> : vector<40x96xf32>
    %35 = tpu.matmul %33, %34, %cst_15 {dimension_numbers = #tpu.dot_dimension_numbers<[1], [0], [0], [1], [0, 0, 1, 1], [], []>} : vector<40x32xbf16>, vector<32x96xbf16>, vector<40x96xf32> -> vector<40x96xf32>
    %36 = arith.truncf %30 : vector<32x32xf32> to vector<32x32xbf16>
    %37 = arith.truncf %31 : vector<32x96xf32> to vector<32x96xbf16>
    %cst_16 = arith.constant dense<0.000000e+00> : vector<32x96xf32>
    %38 = tpu.matmul %36, %37, %cst_16 {dimension_numbers = #tpu.dot_dimension_numbers<[1], [0], [0], [1], [0, 0, 1, 1], [], []>} : vector<32x32xbf16>, vector<32x96xbf16>, vector<32x96xf32> -> vector<32x96xf32>
    %39 = vector.extract_strided_slice %35 {offsets = [0, 0], sizes = [6, 32], strides = [1, 1]} : vector<40x96xf32> to vector<6x32xf32>
    %40 = vector.extract_strided_slice %35 {offsets = [8, 32], sizes = [32, 32], strides = [1, 1]} : vector<40x96xf32> to vector<32x32xf32>
    %41 = vector.extract_strided_slice %38 {offsets = [0, 32], sizes = [32, 32], strides = [1, 1]} : vector<32x96xf32> to vector<32x32xf32>
    %42 = arith.addf %41, %40 : vector<32x32xf32>
    %43 = vector.extract_strided_slice %38 {offsets = [0, 64], sizes = [32, 32], strides = [1, 1]} : vector<32x96xf32> to vector<32x32xf32>
    %44 = arith.truncf %39 : vector<6x32xf32> to vector<6x32xbf16>
    %45 = arith.truncf %42 : vector<32x32xf32> to vector<32x32xbf16>
    %cst_17 = arith.constant dense<0.000000e+00> : vector<6x32xf32>
    %46 = tpu.matmul %44, %45, %cst_17 {dimension_numbers = #tpu.dot_dimension_numbers<[1], [1], [0], [0], [0, 0, 1, 0], [], []>} : vector<6x32xbf16>, vector<32x32xbf16>, vector<6x32xf32> -> vector<6x32xf32>
    %cst_18 = arith.constant 0.176776692 : f32
    %47 = vector.broadcast %cst_18 : f32 to vector<6x32xf32>
    %48 = arith.mulf %46, %47 : vector<6x32xf32>
    %c288 = arith.constant 288 : index
    %c0_19 = arith.constant 0 : index
    %49 = vector.load %arg2[%c288, %c0_19] : memref<520x256xf32, #tpu.memory_space<vmem>>, vector<6x32xf32>
    %50 = arith.addf %48, %49 : vector<6x32xf32>
    %cst_20 = arith.constant dense<0xFF800000> : vector<6xf32>
    %51 = vector.multi_reduction <maximumf>, %50, %cst_20 [1] : vector<6x32xf32> to vector<6xf32>
    %52 = vector.shape_cast %51 : vector<6xf32> to vector<6x1xf32>
    %53 = vector.broadcast %52 : vector<6x1xf32> to vector<6x32xf32>
    %54 = arith.subf %50, %53 : vector<6x32xf32>
    %55 = math.exp %54 : vector<6x32xf32>
    %cst_21 = arith.constant dense<0.000000e+00> : vector<6xf32>
    %56 = vector.multi_reduction <add>, %55, %cst_21 [1] : vector<6x32xf32> to vector<6xf32>
    %57 = vector.shape_cast %56 : vector<6xf32> to vector<6x1xf32>
    %58 = tpu.reciprocal %57 {approx = true} : vector<6x1xf32> -> vector<6x1xf32>
    %59 = vector.broadcast %58 : vector<6x1xf32> to vector<6x32xf32>
    %60 = arith.mulf %55, %59 : vector<6x32xf32>
    %61 = arith.truncf %60 : vector<6x32xf32> to vector<6x32xbf16>
    %62 = arith.truncf %43 : vector<32x32xf32> to vector<32x32xbf16>
    %cst_22 = arith.constant dense<0.000000e+00> : vector<6x32xf32>
    %63 = tpu.matmul %61, %62, %cst_22 {dimension_numbers = #tpu.dot_dimension_numbers<[1], [0], [0], [1], [0, 0, 1, 1], [], []>} : vector<6x32xbf16>, vector<32x32xbf16>, vector<6x32xf32> -> vector<6x32xf32>
    %c0_23 = arith.constant 0 : index
    %c0_24 = arith.constant 0 : index
    %64 = vector.load %arg1[%c0_23, %c0_24] : memref<40x32xf32, #tpu.memory_space<vmem>>, vector<6x32xf32>
    %c136 = arith.constant 136 : index
    %c0_25 = arith.constant 0 : index
    %65 = vector.load %arg2[%c136, %c0_25] : memref<520x256xf32, #tpu.memory_space<vmem>>, vector<32x32xf32>
    %66 = arith.truncf %63 : vector<6x32xf32> to vector<6x32xbf16>
    %67 = arith.truncf %65 : vector<32x32xf32> to vector<32x32xbf16>
    %cst_26 = arith.constant dense<0.000000e+00> : vector<6x32xf32>
    %68 = tpu.matmul %66, %67, %cst_26 {dimension_numbers = #tpu.dot_dimension_numbers<[1], [0], [0], [1], [0, 0, 1, 1], [], []>} : vector<6x32xbf16>, vector<32x32xbf16>, vector<6x32xf32> -> vector<6x32xf32>
    %69 = arith.addf %64, %68 : vector<6x32xf32>
    %c296 = arith.constant 296 : index
    %c0_27 = arith.constant 0 : index
    %70 = vector.load %arg2[%c296, %c0_27] : memref<520x256xf32, #tpu.memory_space<vmem>>, vector<2x6xf32>
    %cst_28 = arith.constant dense<0.000000e+00> : vector<2x32xf32>
    %71 = tpu.matmul %70, %69, %cst_28 {dimension_numbers = #tpu.dot_dimension_numbers<[1], [0], [0], [1], [0, 0, 1, 1], [], []>} : vector<2x6xf32>, vector<6x32xf32>, vector<2x32xf32> -> vector<2x32xf32>
    %c168 = arith.constant 168 : index
    %c0_29 = arith.constant 0 : index
    %72 = vector.load %arg2[%c168, %c0_29] : memref<520x256xf32, #tpu.memory_space<vmem>>, vector<32x32xf32>
    %73 = arith.truncf %71 : vector<2x32xf32> to vector<2x32xbf16>
    %74 = arith.truncf %72 : vector<32x32xf32> to vector<32x32xbf16>
    %cst_30 = arith.constant dense<0.000000e+00> : vector<2x32xf32>
    %75 = tpu.matmul %73, %74, %cst_30 {dimension_numbers = #tpu.dot_dimension_numbers<[1], [0], [0], [1], [0, 0, 1, 1], [], []>} : vector<2x32xbf16>, vector<32x32xbf16>, vector<2x32xf32> -> vector<2x32xf32>
    %c200 = arith.constant 200 : index
    %c0_31 = arith.constant 0 : index
    %76 = vector.load %arg2[%c200, %c0_31] : memref<520x256xf32, #tpu.memory_space<vmem>>, vector<1x32xf32>
    %77 = vector.broadcast %76 : vector<1x32xf32> to vector<2x32xf32>
    %78 = arith.addf %75, %77 : vector<2x32xf32>
    %cst_32 = arith.constant 0.000000e+00 : f32
    %79 = vector.broadcast %cst_32 : f32 to vector<2x32xf32>
    %80 = arith.maximumf %78, %79 : vector<2x32xf32>
    %c208 = arith.constant 208 : index
    %c0_33 = arith.constant 0 : index
    %81 = vector.load %arg2[%c208, %c0_33] : memref<520x256xf32, #tpu.memory_space<vmem>>, vector<32x128xf32>
    %82 = arith.truncf %80 : vector<2x32xf32> to vector<2x32xbf16>
    %83 = arith.truncf %81 : vector<32x128xf32> to vector<32x128xbf16>
    %cst_34 = arith.constant dense<0.000000e+00> : vector<2x128xf32>
    %84 = tpu.matmul %82, %83, %cst_34 {dimension_numbers = #tpu.dot_dimension_numbers<[1], [0], [0], [1], [0, 0, 1, 1], [], []>} : vector<2x32xbf16>, vector<32x128xbf16>, vector<2x128xf32> -> vector<2x128xf32>
    %c240 = arith.constant 240 : index
    %c0_35 = arith.constant 0 : index
    %85 = vector.load %arg2[%c240, %c0_35] : memref<520x256xf32, #tpu.memory_space<vmem>>, vector<1x128xf32>
    %86 = vector.broadcast %85 : vector<1x128xf32> to vector<2x128xf32>
    %87 = arith.addf %84, %86 : vector<2x128xf32>
    %c304 = arith.constant 304 : index
    %c0_36 = arith.constant 0 : index
    %88 = vector.load %arg2[%c304, %c0_36] : memref<520x256xf32, #tpu.memory_space<vmem>>, vector<32x2xf32>
    %cst_37 = arith.constant dense<0.000000e+00> : vector<32x128xf32>
    %89 = tpu.matmul %88, %87, %cst_37 {dimension_numbers = #tpu.dot_dimension_numbers<[1], [0], [0], [1], [0, 0, 1, 1], [], []>} : vector<32x2xf32>, vector<2x128xf32>, vector<32x128xf32> -> vector<32x128xf32>
    %c248 = arith.constant 248 : index
    %c0_38 = arith.constant 0 : index
    %90 = vector.load %arg2[%c248, %c0_38] : memref<520x256xf32, #tpu.memory_space<vmem>>, vector<32x128xf32>
    %91 = arith.truncf %30 : vector<32x32xf32> to vector<32x32xbf16>
    %92 = arith.truncf %90 : vector<32x128xf32> to vector<32x128xbf16>
    %cst_39 = arith.constant dense<0.000000e+00> : vector<32x128xf32>
    %93 = tpu.matmul %91, %92, %cst_39 {dimension_numbers = #tpu.dot_dimension_numbers<[1], [0], [0], [1], [0, 0, 1, 1], [], []>} : vector<32x32xbf16>, vector<32x128xbf16>, vector<32x128xf32> -> vector<32x128xf32>
    %c280 = arith.constant 280 : index
    %c0_40 = arith.constant 0 : index
    %94 = vector.load %arg2[%c280, %c0_40] : memref<520x256xf32, #tpu.memory_space<vmem>>, vector<1x128xf32>
    %95 = vector.broadcast %94 : vector<1x128xf32> to vector<32x128xf32>
    %96 = arith.addf %93, %95 : vector<32x128xf32>
    %97 = arith.mulf %96, %96 : vector<32x128xf32>
    %98 = arith.mulf %96, %97 : vector<32x128xf32>
    %cst_41 = arith.constant 4.471500e-02 : f32
    %99 = vector.broadcast %cst_41 : f32 to vector<32x128xf32>
    %100 = arith.mulf %99, %98 : vector<32x128xf32>
    %101 = arith.addf %96, %100 : vector<32x128xf32>
    %cst_42 = arith.constant 0.797884583 : f32
    %102 = vector.broadcast %cst_42 : f32 to vector<32x128xf32>
    %103 = arith.mulf %102, %101 : vector<32x128xf32>
    %104 = math.tanh %103 : vector<32x128xf32>
    %cst_43 = arith.constant 1.000000e+00 : f32
    %105 = vector.broadcast %cst_43 : f32 to vector<32x128xf32>
    %106 = arith.addf %105, %104 : vector<32x128xf32>
    %cst_44 = arith.constant 5.000000e-01 : f32
    %107 = vector.broadcast %cst_44 : f32 to vector<32x128xf32>
    %108 = arith.mulf %107, %106 : vector<32x128xf32>
    %109 = arith.mulf %96, %108 : vector<32x128xf32>
    %110 = arith.mulf %109, %89 : vector<32x128xf32>
    %c344 = arith.constant 344 : index
    %c0_45 = arith.constant 0 : index
    %111 = vector.load %arg2[%c344, %c0_45] : memref<520x256xf32, #tpu.memory_space<vmem>>, vector<128x16xf32>
    %cst_46 = arith.constant dense<0.000000e+00> : vector<32x16xf32>
    %112 = tpu.matmul %110, %111, %cst_46 {dimension_numbers = #tpu.dot_dimension_numbers<[1], [0], [0], [1], [0, 0, 1, 1], [], []>} : vector<32x128xf32>, vector<128x16xf32>, vector<32x16xf32> -> vector<32x16xf32>
    %113 = arith.negf %112 : vector<32x16xf32>
    %114 = math.exp %113 : vector<32x16xf32>
    %cst_47 = arith.constant 1.000000e+00 : f32
    %115 = vector.broadcast %cst_47 : f32 to vector<32x16xf32>
    %116 = arith.addf %115, %114 : vector<32x16xf32>
    %117 = arith.divf %115, %116 : vector<32x16xf32>
    %c472 = arith.constant 472 : index
    %c0_48 = arith.constant 0 : index
    %118 = vector.load %arg2[%c472, %c0_48] : memref<520x256xf32, #tpu.memory_space<vmem>>, vector<16x256xf32>
    %cst_49 = arith.constant dense<0.000000e+00> : vector<32x256xf32>
    %119 = tpu.matmul %117, %118, %cst_49 {dimension_numbers = #tpu.dot_dimension_numbers<[1], [0], [0], [1], [0, 0, 1, 1], [], []>} : vector<32x16xf32>, vector<16x256xf32>, vector<32x256xf32> -> vector<32x256xf32>
    %c336 = arith.constant 336 : index
    %c0_50 = arith.constant 0 : index
    %120 = vector.load %arg2[%c336, %c0_50] : memref<520x256xf32, #tpu.memory_space<vmem>>, vector<2x32xf32>
    %c488 = arith.constant 488 : index
    %c0_51 = arith.constant 0 : index
    %121 = vector.load %arg2[%c488, %c0_51] : memref<520x256xf32, #tpu.memory_space<vmem>>, vector<32x256xf32>
    %122 = arith.mulf %119, %121 : vector<32x256xf32>
    %cst_52 = arith.constant dense<0.000000e+00> : vector<2x256xf32>
    %123 = tpu.matmul %120, %122, %cst_52 {dimension_numbers = #tpu.dot_dimension_numbers<[1], [0], [0], [1], [0, 0, 1, 1], [], []>} : vector<2x32xf32>, vector<32x256xf32>, vector<2x256xf32> -> vector<2x256xf32>
    %c0_53 = arith.constant 0 : index
    %c0_54 = arith.constant 0 : index
    %124 = vector.load %arg3[%c0_53, %c0_54] : memref<256x640xf32, #tpu.memory_space<vmem>>, vector<256x640xf32>
    %cst_55 = arith.constant dense<0.000000e+00> : vector<2x640xf32>
    %125 = tpu.matmul %123, %124, %cst_55 {dimension_numbers = #tpu.dot_dimension_numbers<[1], [0], [0], [1], [0, 0, 1, 1], [], []>} : vector<2x256xf32>, vector<256x640xf32>, vector<2x640xf32> -> vector<2x640xf32>
    %cst_56 = arith.constant 5.000000e-01 : f32
    %126 = vector.broadcast %cst_56 : f32 to vector<2x640xf32>
    %127 = arith.cmpf ogt, %125, %126 : vector<2x640xf32>
    %128 = arith.extui %127 : vector<2x640xi1> to vector<2x640xi32>
    %129 = arith.sitofp %128 : vector<2x640xi32> to vector<2x640xf32>
    %c0_57 = arith.constant 0 : index
    %c0_58 = arith.constant 0 : index
    %130 = vector.load %arg4[%c0_57, %c0_58] : memref<2x640xf32, #tpu.memory_space<vmem>>, vector<2x640xf32>
    tpu.vector_store %arg4[%c0_57, %c0_58], %129 {strides = array<i32>} : memref<2x640xf32, #tpu.memory_space<vmem>>, vector<2x640xf32>,
    return
  }
}

</mosaic_0001>

<llo_original>
// kernel: medsam_forward.1
$region0: #{medsam_forward.1}
  #allocation0 [shape = 'u32[]', space=smem, size = 0x4, offset = 0x4, fixed_abs, tag = 'smem constant byte address 0x4 - core index']
  #allocation1 [shape = 'u32[144,128]{1,0:T(1,128)}', space=vmem, size = 0x12000, scoped, tag = 'internal scratch']
  %s0 = inlined_call_operand.vmem [shape: f32[32,48], index: 0, kind: input, shape index: {}]
  %s1 = inlined_call_operand.vmem [shape: f32[40,32], index: 1, kind: input, shape index: {}]
  %s2 = inlined_call_operand.vmem [shape: f32[520,256], index: 2, kind: input, shape index: {}]
  %s3 = inlined_call_operand.vmem [shape: f32[256,640], index: 3, kind: input, shape index: {}]
  %s4 = inlined_call_operand.vmem [shape: f32[2,640], index: 4, kind: output, shape index: {}]
  %s5 = sld [smem:[#allocation0]]
  $region26: #{medsam_forward.1} parent=0
    _
  %s7 = ssub.s32 1, %s5
  %s8 = scalar_select 0, %s7, %s5
  // Predicated region
  $region2: #{medsam_forward.1} parent=0 // pred_check
    _
  $region3: #{medsam_forward.1} parent=0 // pred_check_branch
    %10 = sbr.rel (0) target = $region5
  $region4: #{medsam_forward.1} parent=0 // pred_region
    _
  $region5: #{medsam_forward.1} parent=0 // pred_fallthru
    _
  // Predicated region
  $region6: #{medsam_forward.1} parent=0 // pred_check
    _
  $region7: #{medsam_forward.1} parent=0 // pred_check_branch
    %12 = sbr.rel (0) target = $region9
  $region8: #{medsam_forward.1} parent=0 // pred_region
    _
  $region9: #{medsam_forward.1} parent=0 // pred_fallthru
    _
  // Predicated region
  $region10: #{medsam_forward.1} parent=0 // pred_check
    _
  $region11: #{medsam_forward.1} parent=0 // pred_check_branch
    %14 = sbr.rel (0) target = $region13
  $region12: #{medsam_forward.1} parent=0 // pred_region
    _
  $region13: #{medsam_forward.1} parent=0 // pred_fallthru
    _
  // Predicated region
  $region14: #{medsam_forward.1} parent=0 // pred_check
    _
  $region15: #{medsam_forward.1} parent=0 // pred_check_branch
    %16 = sbr.rel (0) target = $region17
  $region16: #{medsam_forward.1} parent=0 // pred_region
    _
  $region17: #{medsam_forward.1} parent=0 // pred_fallthru
    _
  %v18 = vld [vmem:[%s0] sm:$0xff]
  %v19 = vld [vmem:[%s0 + $0x8] sm:$0xff]
  %v20 = vld [vmem:[%s0 + $0x10] sm:$0xff]
  %v21 = vld [vmem:[%s0 + $0x18] sm:$0xff]
  %v22 = vld [vmem:[%s2] sm:$0xff]
  %v23 = vld [vmem:[%s2 + $0x10] sm:$0xff]
  %v24 = vld [vmem:[%s2 + $0x20] sm:$0xff]
  %v25 = vld [vmem:[%s2 + $0x30] sm:$0xff]
  %v26 = vld [vmem:[%s2 + $0x40] sm:$0xff]
  %v27 = vld [vmem:[%s2 + $0x50] sm:$0xff]
  %v28 = vpack.c.bf16 %v19, %v18
  %v29 = vpack.c.bf16 %v21, %v20
  %v30 = vpack.c.bf16 %v23, %v22
  %v31 = vpack.c.bf16 %v25, %v24
  %v32 = vpack.c.bf16 %v27, %v26
  %v33 = vld [vmem:[%s2 + $0x60] ss:$0 sm:$0xff]
  %vm34 = vcmask 392192
  %v36 = vsel %vm34, %v28, 0
  %v39 = vsel %vm34, %v29, 0
  %41 = vmatprep.subr.bf16.mxu0 0
  %42 = vmatpush1.bf16.msra.mxu0 %v30
  %43 = vmatprep.subr.bf16.mxu0 0
  %44 = vmatpush1.bf16.msra.mxu0 %v31
  %45 = vmatprep.subr.bf16.mxu0 0
  %46 = vmatpush1.bf16.msra.mxu0 %v32
  %47 = vmatprep.subr.bf16.mxu0 0
  %48 = vmatpush1.bf16.msra.mxu0 0
  %49 = vmatprep.subr.bf16.mxu0 0
  %50 = vmatpush1.bf16.msra.mxu0 0
  %51 = vmatprep.subr.bf16.mxu0 0
  %52 = vmatpush1.bf16.msra.mxu0 0
  %53 = vmatprep.subr.bf16.mxu0 0
  %54 = vmatpush1.bf16.msra.mxu0 0
  %55 = vmatprep.subr.bf16.mxu0 0
  %56 = vmatpush1.bf16.msra.mxu0 0
  %57 = vmatprep.subr.bf16.mxu0 0
  %58 = vmatpush1.bf16.msra.mxu0 0
  %59 = vmatprep.subr.bf16.mxu0 0
  %60 = vmatpush1.bf16.msra.mxu0 0
  %61 = vmatprep.subr.bf16.mxu0 0
  %62 = vmatpush1.bf16.msra.mxu0 0
  %63 = vmatprep.subr.bf16.mxu0 0
  %64 = vmatpush1.bf16.msra.mxu0 0
  %65 = vmatprep.subr.bf16.mxu0 0
  %66 = vmatpush1.bf16.msra.mxu0 0
  %67 = vmatprep.subr.bf16.mxu0 0
  %68 = vmatpush1.bf16.msra.mxu0 0
  %69 = vmatprep.subr.bf16.mxu0 0
  %70 = vmatpush1.bf16.msra.mxu0 0
  %71 = vmatprep.subr.bf16.mxu0 0
  %72 = vmatpush1.bf16.msra.mxu0 0
  %73 = vmatprep.mubr.bf16.mxu0 0
  %74 = vmatmul.mubr.bf16.gmra.mrb[0].mxu0 %v36
  %v75 = vpop.f32.mrb[0].mxu0
  %v76 = vadd.f32 %v33, %v75
  %v77 = vpop.f32.mrb[0].mxu0
  %v78 = vpop.f32.mrb[0].mxu0
  %v79 = vadd.f32 %v33, %v78
  %v80 = vpop.f32.mrb[0].mxu0
  %81 = vmatprep.mubr.bf16.mxu0 0
  %82 = vmatmul.mubr.bf16.gmra.mrb[0].mxu0 %v39
  %v83 = vpop.f32.mrb[0].mxu0
  %v84 = vadd.f32 %v33, %v83
  %v85 = vpop.f32.mrb[0].mxu0
  %v86 = vpop.f32.mrb[0].mxu0
  %v87 = vadd.f32 %v33, %v86
  %v88 = vpop.f32.mrb[0].mxu0
  %89 = vdwg.mxu0
  %v90 = vmul.f32 %v76, %v76
  %v91 = vmul.f32 %v79, %v79
  %v92 = vmul.f32 %v84, %v84
  %v93 = vmul.f32 %v87, %v87
  %v94 = vmul.f32 %v76, %v90
  %v95 = vmul.f32 %v79, %v91
  %v96 = vmul.f32 %v84, %v92
  %v97 = vmul.f32 %v87, %v93
  %v98 = vmul.f32 %v94, 0.044715
  %v99 = vmul.f32 %v95, 0.044715
  %v100 = vmul.f32 %v96, 0.044715
  %v101 = vmul.f32 %v97, 0.044715
  %v102 = vadd.f32 %v76, %v98
  %v103 = vadd.f32 %v79, %v99
  %v104 = vadd.f32 %v84, %v100
  %v105 = vadd.f32 %v87, %v101
  %v106 = vmul.f32 %v102, 0.7978846
  %v107 = vmul.f32 %v103, 0.7978846
  %v108 = vmul.f32 %v104, 0.7978846
  %v109 = vmul.f32 %v105, 0.7978846
  %v110 = vtanh.pop %v106
  %v111 = vtanh.pop %v107
  %v112 = vtanh.pop %v108
  %v113 = vtanh.pop %v109
  %v114 = vadd.f32 %v110, 1.0
  %v115 = vadd.f32 %v111, 1.0
  %v116 = vadd.f32 %v112, 1.0
  %v117 = vadd.f32 %v113, 1.0
  %v118 = vmul.f32 %v114, 0.5
  %v119 = vmul.f32 %v115, 0.5
  %v120 = vmul.f32 %v116, 0.5
  %v121 = vmul.f32 %v117, 0.5
  %v122 = vmul.f32 %v76, %v118
  %v123 = vmul.f32 %v79, %v119
  %v124 = vmul.f32 %v84, %v120
  %v125 = vmul.f32 %v87, %v121
  %v126 = vld [vmem:[%s2 + $0x70] sm:$0xff]
  %v127 = vld [vmem:[%s2 + $0x80] sm:$0xff]
  %v128 = vld [vmem:[%s2 + $0x90] sm:$0xff]
  %v129 = vld [vmem:[%s2 + $0xa0] sm:$0xff]
  %v130 = vpack.c.bf16 %v123, %v122
  %v131 = vpack.c.bf16 %v125, %v124
  %v132 = vpack.c.bf16 %v127, %v126
  %v133 = vpack.c.bf16 %v129, %v128
  %v134 = vld [vmem:[%s2 + $0xb0] ss:$0 sm:$0xff]
  %vm135 = vcmask 261120
  %v137 = vsel %vm135, %v130, 0
  %v140 = vsel %vm135, %v131, 0
  %142 = vmatprep.subr.bf16.mxu0 0
  %143 = vmatpush1.bf16.msra.mxu0 %v132
  %144 = vmatprep.subr.bf16.mxu0 0
  %145 = vmatpush1.bf16.msra.mxu0 %v133
  %146 = vmatprep.subr.bf16.mxu0 0
  %147 = vmatpush1.bf16.msra.mxu0 0
  %148 = vmatprep.subr.bf16.mxu0 0
  %149 = vmatpush1.bf16.msra.mxu0 0
  %150 = vmatprep.subr.bf16.mxu0 0
  %151 = vmatpush1.bf16.msra.mxu0 0
  %152 = vmatprep.subr.bf16.mxu0 0
  %153 = vmatpush1.bf16.msra.mxu0 0
  %154 = vmatprep.subr.bf16.mxu0 0
  %155 = vmatpush1.bf16.msra.mxu0 0
  %156 = vmatprep.subr.bf16.mxu0 0
  %157 = vmatpush1.bf16.msra.mxu0 0
  %158 = vmatprep.subr.bf16.mxu0 0
  %159 = vmatpush1.bf16.msra.mxu0 0
  %160 = vmatprep.subr.bf16.mxu0 0
  %161 = vmatpush1.bf16.msra.mxu0 0
  %162 = vmatprep.subr.bf16.mxu0 0
  %163 = vmatpush1.bf16.msra.mxu0 0
  %164 = vmatprep.subr.bf16.mxu0 0
  %165 = vmatpush1.bf16.msra.mxu0 0
  %166 = vmatprep.subr.bf16.mxu0 0
  %167 = vmatpush1.bf16.msra.mxu0 0
  %168 = vmatprep.subr.bf16.mxu0 0
  %169 = vmatpush1.bf16.msra.mxu0 0
  %170 = vmatprep.subr.bf16.mxu0 0
  %171 = vmatpush1.bf16.msra.mxu0 0
  %172 = vmatprep.subr.bf16.mxu0 0
  %173 = vmatpush1.bf16.msra.mxu0 0
  %174 = vmatprep.mubr.bf16.mxu0 0
  %175 = vmatmul.mubr.bf16.gmra.mrb[0].mxu0 %v137
  %v176 = vpop.f32.mrb[0].mxu0
  %v177 = vadd.f32 %v134, %v176
  %v178 = vpop.f32.mrb[0].mxu0
  %v179 = vpop.f32.mrb[0].mxu0
  %v180 = vadd.f32 %v134, %v179
  %v181 = vpop.f32.mrb[0].mxu0
  %182 = vmatprep.mubr.bf16.mxu0 0
  %183 = vmatmul.mubr.bf16.gmra.mrb[0].mxu0 %v140
  %v184 = vpop.f32.mrb[0].mxu0
  %v185 = vadd.f32 %v134, %v184
  %v186 = vpop.f32.mrb[0].mxu0
  %v187 = vpop.f32.mrb[0].mxu0
  %v188 = vadd.f32 %v134, %v187
  %v189 = vpop.f32.mrb[0].mxu0
  %190 = vdwg.mxu0
  %v191 = vld [vmem:[%s2 + $0xc0] ss:$0 sm:$0xff]
  %v192 = vadd.f32 %v177, %v191
  %v193 = vadd.f32 %v180, %v191
  %v194 = vadd.f32 %v185, %v191
  %v195 = vadd.f32 %v188, %v191
  %v196 = vld [vmem:[%s2 + $0xd0] sm:$0xff]
  %v197 = vld [vmem:[%s2 + $0xe0] sm:$0xff]
  %v198 = vld [vmem:[%s2 + $0xf0] sm:$0xff]
  %v199 = vld [vmem:[%s2 + $0x100] sm:$0xff]
  %v200 = vld [vmem:[%s1] sm:$0xff]
  %v201 = vld [vmem:[%s1 + $0x8] sm:$0xff]
  %v202 = vld [vmem:[%s1 + $0x10] sm:$0xff]
  %v203 = vld [vmem:[%s1 + $0x18] sm:$0xff]
  %v204 = vld [vmem:[%s1 + $0x20] sm:$0xff]
  %v205 = vpack.c.bf16 %v201, %v200
  %v206 = vpack.c.bf16 %v203, %v202
  %v207 = vpack.c.bf16 %v204, %v204
  %v208 = vpack.c.bf16 %v197, %v196
  %v209 = vpack.c.bf16 %v199, %v198
  %v211 = vsel %vm135, %v205, 0
  %v214 = vsel %vm135, %v206, 0
  %v217 = vsel %vm135, %v207, 0
  %219 = vmatprep.subr.bf16.mxu0 0
  %220 = vmatpush1.bf16.msra.mxu0 %v208
  %221 = vmatprep.subr.bf16.mxu0 0
  %222 = vmatpush1.bf16.msra.mxu0 %v209
  %223 = vmatprep.subr.bf16.mxu0 0
  %224 = vmatpush1.bf16.msra.mxu0 0
  %225 = vmatprep.subr.bf16.mxu0 0
  %226 = vmatpush1.bf16.msra.mxu0 0
  %227 = vmatprep.subr.bf16.mxu0 0
  %228 = vmatpush1.bf16.msra.mxu0 0
  %229 = vmatprep.subr.bf16.mxu0 0
  %230 = vmatpush1.bf16.msra.mxu0 0
  %231 = vmatprep.subr.bf16.mxu0 0
  %232 = vmatpush1.bf16.msra.mxu0 0
  %233 = vmatprep.subr.bf16.mxu0 0
  %234 = vmatpush1.bf16.msra.mxu0 0
  %235 = vmatprep.subr.bf16.mxu0 0
  %236 = vmatpush1.bf16.msra.mxu0 0
  %237 = vmatprep.subr.bf16.mxu0 0
  %238 = vmatpush1.bf16.msra.mxu0 0
  %239 = vmatprep.subr.bf16.mxu0 0
  %240 = vmatpush1.bf16.msra.mxu0 0
  %241 = vmatprep.subr.bf16.mxu0 0
  %242 = vmatpush1.bf16.msra.mxu0 0
  %243 = vmatprep.subr.bf16.mxu0 0
  %244 = vmatpush1.bf16.msra.mxu0 0
  %245 = vmatprep.subr.bf16.mxu0 0
  %246 = vmatpush1.bf16.msra.mxu0 0
  %247 = vmatprep.subr.bf16.mxu0 0
  %248 = vmatpush1.bf16.msra.mxu0 0
  %249 = vmatprep.subr.bf16.mxu0 0
  %250 = vmatpush1.bf16.msra.mxu0 0
  %251 = vmatprep.mubr.bf16.mxu0 0
  %252 = vmatmul.mubr.bf16.gmra.mrb[0].mxu0 %v211
  %v253 = vpop.f32.mrb[0].mxu0
  %v254 = vadd.f32 0.0, %v253
  %v255 = vpop.f32.mrb[0].mxu0
  %v256 = vpop.f32.mrb[0].mxu0
  %v257 = vadd.f32 0.0, %v256
  %v258 = vpop.f32.mrb[0].mxu0
  %259 = vmatprep.mubr.bf16.mxu0 0
  %260 = vmatmul.mubr.bf16.gmra.mrb[0].mxu0 %v214
  %v261 = vpop.f32.mrb[0].mxu0
  %v262 = vadd.f32 0.0, %v261
  %v263 = vpop.f32.mrb[0].mxu0
  %v264 = vpop.f32.mrb[0].mxu0
  %v265 = vadd.f32 0.0, %v264
  %v266 = vpop.f32.mrb[0].mxu0
  %267 = vmatprep.mubr.bf16.mxu0 0
  %268 = vmatmul.mubr.bf16.gmra.mrb[0].mxu0 %v217
  %v269 = vpop.f32.mrb[0].mxu0
  %v270 = vadd.f32 0.0, %v269
  %v271 = vpop.f32.mrb[0].mxu0
  %v272 = vpop.f32.mrb[0].mxu0
  %v273 = vpop.f32.mrb[0].mxu0
  %274 = vdwg.mxu0
  %v275 = vpack.c.bf16 %v193, %v192
  %v276 = vpack.c.bf16 %v195, %v194
  %v278 = vsel %vm135, %v275, 0
  %v281 = vsel %vm135, %v276, 0
  %283 = vmatprep.subr.bf16.mxu0 0
  %284 = vmatpush1.bf16.msra.mxu0 %v208
  %285 = vmatprep.subr.bf16.mxu0 0
  %286 = vmatpush1.bf16.msra.mxu0 %v209
  %287 = vmatprep.subr.bf16.mxu0 0
  %288 = vmatpush1.bf16.msra.mxu0 0
  %289 = vmatprep.subr.bf16.mxu0 0
  %290 = vmatpush1.bf16.msra.mxu0 0
  %291 = vmatprep.subr.bf16.mxu0 0
  %292 = vmatpush1.bf16.msra.mxu0 0
  %293 = vmatprep.subr.bf16.mxu0 0
  %294 = vmatpush1.bf16.msra.mxu0 0
  %295 = vmatprep.subr.bf16.mxu0 0
  %296 = vmatpush1.bf16.msra.mxu0 0
  %297 = vmatprep.subr.bf16.mxu0 0
  %298 = vmatpush1.bf16.msra.mxu0 0
  %299 = vmatprep.subr.bf16.mxu0 0
  %300 = vmatpush1.bf16.msra.mxu0 0
  %301 = vmatprep.subr.bf16.mxu0 0
  %302 = vmatpush1.bf16.msra.mxu0 0
  %303 = vmatprep.subr.bf16.mxu0 0
  %304 = vmatpush1.bf16.msra.mxu0 0
  %305 = vmatprep.subr.bf16.mxu0 0
  %306 = vmatpush1.bf16.msra.mxu0 0
  %307 = vmatprep.subr.bf16.mxu0 0
  %308 = vmatpush1.bf16.msra.mxu0 0
  %309 = vmatprep.subr.bf16.mxu0 0
  %310 = vmatpush1.bf16.msra.mxu0 0
  %311 = vmatprep.subr.bf16.mxu0 0
  %312 = vmatpush1.bf16.msra.mxu0 0
  %313 = vmatprep.subr.bf16.mxu0 0
  %314 = vmatpush1.bf16.msra.mxu0 0
  %315 = vmatprep.mubr.bf16.mxu0 0
  %316 = vmatmul.mubr.bf16.gmra.mrb[0].mxu0 %v278
  %v317 = vpop.f32.mrb[0].mxu0
  %v318 = vadd.f32 0.0, %v317
  %v319 = vpop.f32.mrb[0].mxu0
  %v320 = vpop.f32.mrb[0].mxu0
  %v321 = vadd.f32 0.0, %v320
  %v322 = vpop.f32.mrb[0].mxu0
  %323 = vmatprep.mubr.bf16.mxu0 0
  %324 = vmatmul.mubr.bf16.gmra.mrb[0].mxu0 %v281
  %v325 = vpop.f32.mrb[0].mxu0
  %v326 = vadd.f32 0.0, %v325
  %v327 = vpop.f32.mrb[0].mxu0
  %v328 = vpop.f32.mrb[0].mxu0
  %v329 = vadd.f32 0.0, %v328
  %v330 = vpop.f32.mrb[0].mxu0
  %331 = vdwg.mxu0
  %v332 = vadd.f32 %v318, %v257
  %v333 = vadd.f32 %v321, %v262
  %v334 = vadd.f32 %v326, %v265
  %v335 = vadd.f32 %v329, %v270
  %v336 = vpack.c.bf16 %v254, %v254
  %v337 = vpack.c.bf16 %v333, %v332
  %v338 = vpack.c.bf16 %v335, %v334
  %341 = vrot.lane.b32.xlu0 %v337, 96
  %v342 = vpop.permute.xlu0 %341
  %343 = vrot.lane.b32.xlu0 %v338, 96
  %v344 = vpop.permute.xlu0 %343
  %v346 = vsel %vm135, %v336, 0
  %v349 = vsel %vm135, %v342, 0
  %v352 = vsel %vm135, %v344, 0
  %354 = vmatprep.subr.bf16.mxu0 0
  %355 = vmatpush1.bf16.xpose.msra.mxu0 %v349
  %356 = vmatprep.subr.bf16.mxu0 0
  %357 = vmatpush1.bf16.xpose.msra.mxu0 %v352
  %358 = vmatprep.subr.bf16.mxu0 0
  %359 = vmatpush1.bf16.xpose.msra.mxu0 0
  %360 = vmatprep.subr.bf16.mxu0 0
  %361 = vmatpush1.bf16.xpose.msra.mxu0 0
  %362 = vmatprep.subr.bf16.mxu0 0
  %363 = vmatpush1.bf16.xpose.msra.mxu0 0
  %364 = vmatprep.subr.bf16.mxu0 0
  %365 = vmatpush1.bf16.xpose.msra.mxu0 0
  %366 = vmatprep.subr.bf16.mxu0 0
  %367 = vmatpush1.bf16.xpose.msra.mxu0 0
  %368 = vmatprep.subr.bf16.mxu0 0
  %369 = vmatpush1.bf16.xpose.msra.mxu0 0
  %370 = vmatprep.subr.bf16.mxu0 0
  %371 = vmatpush1.bf16.xpose.msra.mxu0 0
  %372 = vmatprep.subr.bf16.mxu0 0
  %373 = vmatpush1.bf16.xpose.msra.mxu0 0
  %374 = vmatprep.subr.bf16.mxu0 0
  %375 = vmatpush1.bf16.xpose.msra.mxu0 0
  %376 = vmatprep.subr.bf16.mxu0 0
  %377 = vmatpush1.bf16.xpose.msra.mxu0 0
  %378 = vmatprep.subr.bf16.mxu0 0
  %379 = vmatpush1.bf16.xpose.msra.mxu0 0
  %380 = vmatprep.subr.bf16.mxu0 0
  %381 = vmatpush1.bf16.xpose.msra.mxu0 0
  %382 = vmatprep.subr.bf16.mxu0 0
  %383 = vmatpush1.bf16.xpose.msra.mxu0 0
  %384 = vmatprep.subr.bf16.mxu0 0
  %385 = vmatpush1.bf16.xpose.msra.mxu0 0
  %386 = vmatprep.mubr.bf16.mxu0 0
  %387 = vmatmul.mubr.bf16.gmra.mrb[0].mxu0 %v346
  %v388 = vpop.f32.mrb[0].mxu0
  %v389 = vadd.f32 0.0, %v388
  %v390 = vpop.f32.mrb[0].mxu0
  %v391 = vpop.f32.mrb[0].mxu0
  %v392 = vpop.f32.mrb[0].mxu0
  %393 = vdwg.mxu0
  %v394 = vmul.f32 %v389, 0.17677669
  %v395 = vld [vmem:[%s2 + $0x240] sm:$0x3f]
  %v396 = vadd.f32 %v394, %v395
  %vm397 = vcmask 259072
  %v398 = vsel %vm397, %v396, -inf
  %399 = vmax.xlane.f32.xlu0 %v398
  %v400 = vpop.xlane.xlu0 %399
  %v401 = vsub.f32 %v396, %v400
  %v402 = vmul.f32 %v401, 1.442695
  %v403 = vpow.pop %v402
  %v404 = vsel %vm397, %v403, 0.0
  %405 = vadd.xlane.f32.xlu0 %v404
  %v406 = vpop.xlane.xlu0 %405
  %v407 = vrcp.pop %v406
  %v408 = vmul.f32 %v403, %v407
  %v409 = vpack.c.bf16 %v408, %v408
  %v410 = vpack.c.bf16 %v321, %v318
  %v411 = vpack.c.bf16 %v329, %v326
  %414 = vrot.lane.b32.xlu0 %v410, 64
  %v415 = vpop.permute.xlu0 %414
  %416 = vrot.lane.b32.xlu0 %v411, 64
  %v417 = vpop.permute.xlu0 %416
  %v421 = vsel %vm135, %v409, 0
  %423 = vmatprep.subr.bf16.mxu0 0
  %424 = vmatpush1.bf16.msra.mxu0 %v415
  %425 = vmatprep.subr.bf16.mxu0 0
  %426 = vmatpush1.bf16.msra.mxu0 %v417
  %427 = vmatprep.subr.bf16.mxu0 0
  %428 = vmatpush1.bf16.msra.mxu0 0
  %429 = vmatprep.subr.bf16.mxu0 0
  %430 = vmatpush1.bf16.msra.mxu0 0
  %431 = vmatprep.subr.bf16.mxu0 0
  %432 = vmatpush1.bf16.msra.mxu0 0
  %433 = vmatprep.subr.bf16.mxu0 0
  %434 = vmatpush1.bf16.msra.mxu0 0
  %435 = vmatprep.subr.bf16.mxu0 0
  %436 = vmatpush1.bf16.msra.mxu0 0
  %437 = vmatprep.subr.bf16.mxu0 0
  %438 = vmatpush1.bf16.msra.mxu0 0
  %439 = vmatprep.subr.bf16.mxu0 0
  %440 = vmatpush1.bf16.msra.mxu0 0
  %441 = vmatprep.subr.bf16.mxu0 0
  %442 = vmatpush1.bf16.msra.mxu0 0
  %443 = vmatprep.subr.bf16.mxu0 0
  %444 = vmatpush1.bf16.msra.mxu0 0
  %445 = vmatprep.subr.bf16.mxu0 0
  %446 = vmatpush1.bf16.msra.mxu0 0
  %447 = vmatprep.subr.bf16.mxu0 0
  %448 = vmatpush1.bf16.msra.mxu0 0
  %449 = vmatprep.subr.bf16.mxu0 0
  %450 = vmatpush1.bf16.msra.mxu0 0
  %451 = vmatprep.subr.bf16.mxu0 0
  %452 = vmatpush1.bf16.msra.mxu0 0
  %453 = vmatprep.subr.bf16.mxu0 0
  %454 = vmatpush1.bf16.msra.mxu0 0
  %455 = vmatprep.mubr.bf16.mxu0 0
  %456 = vmatmul.mubr.bf16.gmra.mrb[0].mxu0 %v421
  %v457 = vpop.f32.mrb[0].mxu0
  %v458 = vadd.f32 0.0, %v457
  %v459 = vpop.f32.mrb[0].mxu0
  %v460 = vpop.f32.mrb[0].mxu0
  %v461 = vpop.f32.mrb[0].mxu0
  %462 = vdwg.mxu0
  %v463 = vld [vmem:[%s1] sm:$0x3f]
  %v464 = vld [vmem:[%s2 + $0x110] sm:$0xff]
  %v465 = vld [vmem:[%s2 + $0x120] sm:$0xff]
  %v466 = vld [vmem:[%s2 + $0x130] sm:$0xff]
  %v467 = vld [vmem:[%s2 + $0x140] sm:$0xff]
  %v468 = vpack.c.bf16 %v458, %v458
  %v469 = vpack.c.bf16 %v465, %v464
  %v470 = vpack.c.bf16 %v467, %v466
  %v472 = vsel %vm135, %v468, 0
  %474 = vmatprep.subr.bf16.mxu0 0
  %475 = vmatpush1.bf16.msra.mxu0 %v469
  %476 = vmatprep.subr.bf16.mxu0 0
  %477 = vmatpush1.bf16.msra.mxu0 %v470
  %478 = vmatprep.subr.bf16.mxu0 0
  %479 = vmatpush1.bf16.msra.mxu0 0
  %480 = vmatprep.subr.bf16.mxu0 0
  %481 = vmatpush1.bf16.msra.mxu0 0
  %482 = vmatprep.subr.bf16.mxu0 0
  %483 = vmatpush1.bf16.msra.mxu0 0
  %484 = vmatprep.subr.bf16.mxu0 0
  %485 = vmatpush1.bf16.msra.mxu0 0
  %486 = vmatprep.subr.bf16.mxu0 0
  %487 = vmatpush1.bf16.msra.mxu0 0
  %488 = vmatprep.subr.bf16.mxu0 0
  %489 = vmatpush1.bf16.msra.mxu0 0
  %490 = vmatprep.subr.bf16.mxu0 0
  %491 = vmatpush1.bf16.msra.mxu0 0
  %492 = vmatprep.subr.bf16.mxu0 0
  %493 = vmatpush1.bf16.msra.mxu0 0
  %494 = vmatprep.subr.bf16.mxu0 0
  %495 = vmatpush1.bf16.msra.mxu0 0
  %496 = vmatprep.subr.bf16.mxu0 0
  %497 = vmatpush1.bf16.msra.mxu0 0
  %498 = vmatprep.subr.bf16.mxu0 0
  %499 = vmatpush1.bf16.msra.mxu0 0
  %500 = vmatprep.subr.bf16.mxu0 0
  %501 = vmatpush1.bf16.msra.mxu0 0
  %502 = vmatprep.subr.bf16.mxu0 0
  %503 = vmatpush1.bf16.msra.mxu0 0
  %504 = vmatprep.subr.bf16.mxu0 0
  %505 = vmatpush1.bf16.msra.mxu0 0
  %506 = vmatprep.mubr.bf16.mxu0 0
  %507 = vmatmul.mubr.bf16.gmra.mrb[0].mxu0 %v472
  %v508 = vpop.f32.mrb[0].mxu0
  %v509 = vadd.f32 0.0, %v508
  %v510 = vpop.f32.mrb[0].mxu0
  %v511 = vpop.f32.mrb[0].mxu0
  %v512 = vpop.f32.mrb[0].mxu0
  %513 = vdwg.mxu0
  %v514 = vadd.f32 %v463, %v509
  %v515 = vld [vmem:[%s2 + $0x250] sm:$0x3]
  %vm516 = vcmask 48128
  %v518 = vsel %vm516, %v515, 0
  %vm520 = vcmask 1045504
  %v522 = vsel %vm520, %v514, 0
  %524 = vmatprep.subr.mxu0 0.0
  %525 = vmatpush1.msra.mxu0 %v522
  %526 = vmatprep.subr.mxu0 0.0
  %527 = vmatpush1.msra.mxu0 0.0
  %528 = vmatprep.subr.mxu0 0.0
  %529 = vmatpush1.msra.mxu0 0.0
  %530 = vmatprep.subr.mxu0 0.0
  %531 = vmatpush1.msra.mxu0 0.0
  %532 = vmatprep.subr.mxu0 0.0
  %533 = vmatpush1.msra.mxu0 0.0
  %534 = vmatprep.subr.mxu0 0.0
  %535 = vmatpush1.msra.mxu0 0.0
  %536 = vmatprep.subr.mxu0 0.0
  %537 = vmatpush1.msra.mxu0 0.0
  %538 = vmatprep.subr.mxu0 0.0
  %539 = vmatpush1.msra.mxu0 0.0
  %540 = vmatprep.subr.mxu0 0.0
  %541 = vmatpush1.msra.mxu0 0.0
  %542 = vmatprep.subr.mxu0 0.0
  %543 = vmatpush1.msra.mxu0 0.0
  %544 = vmatprep.subr.mxu0 0.0
  %545 = vmatpush1.msra.mxu0 0.0
  %546 = vmatprep.subr.mxu0 0.0
  %547 = vmatpush1.msra.mxu0 0.0
  %548 = vmatprep.subr.mxu0 0.0
  %549 = vmatpush1.msra.mxu0 0.0
  %550 = vmatprep.subr.mxu0 0.0
  %551 = vmatpush1.msra.mxu0 0.0
  %552 = vmatprep.subr.mxu0 0.0
  %553 = vmatpush1.msra.mxu0 0.0
  %554 = vmatprep.subr.mxu0 0.0
  %555 = vmatpush1.msra.mxu0 0.0
  %556 = vmatprep.subr.mxu0 0.0
  %557 = vmatpush1.msra.mxu0 0.0
  %558 = vmatprep.subr.mxu0 0.0
  %559 = vmatpush1.msra.mxu0 0.0
  %560 = vmatprep.subr.mxu0 0.0
  %561 = vmatpush1.msra.mxu0 0.0
  %562 = vmatprep.subr.mxu0 0.0
  %563 = vmatpush1.msra.mxu0 0.0
  %564 = vmatprep.subr.mxu0 0.0
  %565 = vmatpush1.msra.mxu0 0.0
  %566 = vmatprep.subr.mxu0 0.0
  %567 = vmatpush1.msra.mxu0 0.0
  %568 = vmatprep.subr.mxu0 0.0
  %569 = vmatpush1.msra.mxu0 0.0
  %570 = vmatprep.subr.mxu0 0.0
  %571 = vmatpush1.msra.mxu0 0.0
  %572 = vmatprep.subr.mxu0 0.0
  %573 = vmatpush1.msra.mxu0 0.0
  %574 = vmatprep.subr.mxu0 0.0
  %575 = vmatpush1.msra.mxu0 0.0
  %576 = vmatprep.subr.mxu0 0.0
  %577 = vmatpush1.msra.mxu0 0.0
  %578 = vmatprep.subr.mxu0 0.0
  %579 = vmatpush1.msra.mxu0 0.0
  %580 = vmatprep.subr.mxu0 0.0
  %581 = vmatpush1.msra.mxu0 0.0
  %582 = vmatprep.subr.mxu0 0.0
  %583 = vmatpush1.msra.mxu0 0.0
  %584 = vmatprep.subr.mxu0 0.0
  %585 = vmatpush1.msra.mxu0 0.0
  %586 = vmatprep.subr.mxu0 0.0
  %587 = vmatpush1.msra.mxu0 0.0
  %588 = vmatprep.mubr.f32.mxu0 0.0
  %589 = vmatmul.mubr.f32.gmra.mrb[0].mxu0 %v518
  %v590 = vpop.f32.mrb[0].mxu0
  %v591 = vadd.f32 0.0, %v590
  %v592 = vpop.f32.mrb[0].mxu0
  %593 = vdwg.mxu0
  %v594 = vld [vmem:[%s2 + $0x150] sm:$0xff]
  %v595 = vld [vmem:[%s2 + $0x160] sm:$0xff]
  %v596 = vld [vmem:[%s2 + $0x170] sm:$0xff]
  %v597 = vld [vmem:[%s2 + $0x180] sm:$0xff]
  %v598 = vpack.c.bf16 %v591, %v591
  %v599 = vpack.c.bf16 %v595, %v594
  %v600 = vpack.c.bf16 %v597, %v596
  %v601 = vld [vmem:[%s2 + $0x190] ss:$0 sm:$0xff]
  %v603 = vsel %vm135, %v598, 0
  %605 = vmatprep.subr.bf16.mxu0 0
  %606 = vmatpush1.bf16.msra.mxu0 %v599
  %607 = vmatprep.subr.bf16.mxu0 0
  %608 = vmatpush1.bf16.msra.mxu0 %v600
  %609 = vmatprep.subr.bf16.mxu0 0
  %610 = vmatpush1.bf16.msra.mxu0 0
  %611 = vmatprep.subr.bf16.mxu0 0
  %612 = vmatpush1.bf16.msra.mxu0 0
  %613 = vmatprep.subr.bf16.mxu0 0
  %614 = vmatpush1.bf16.msra.mxu0 0
  %615 = vmatprep.subr.bf16.mxu0 0
  %616 = vmatpush1.bf16.msra.mxu0 0
  %617 = vmatprep.subr.bf16.mxu0 0
  %618 = vmatpush1.bf16.msra.mxu0 0
  %619 = vmatprep.subr.bf16.mxu0 0
  %620 = vmatpush1.bf16.msra.mxu0 0
  %621 = vmatprep.subr.bf16.mxu0 0
  %622 = vmatpush1.bf16.msra.mxu0 0
  %623 = vmatprep.subr.bf16.mxu0 0
  %624 = vmatpush1.bf16.msra.mxu0 0
  %625 = vmatprep.subr.bf16.mxu0 0
  %626 = vmatpush1.bf16.msra.mxu0 0
  %627 = vmatprep.subr.bf16.mxu0 0
  %628 = vmatpush1.bf16.msra.mxu0 0
  %629 = vmatprep.subr.bf16.mxu0 0
  %630 = vmatpush1.bf16.msra.mxu0 0
  %631 = vmatprep.subr.bf16.mxu0 0
  %632 = vmatpush1.bf16.msra.mxu0 0
  %633 = vmatprep.subr.bf16.mxu0 0
  %634 = vmatpush1.bf16.msra.mxu0 0
  %635 = vmatprep.subr.bf16.mxu0 0
  %636 = vmatpush1.bf16.msra.mxu0 0
  %637 = vmatprep.mubr.bf16.mxu0 0
  %638 = vmatmul.mubr.bf16.gmra.mrb[0].mxu0 %v603
  %v639 = vpop.f32.mrb[0].mxu0
  %v640 = vadd.f32 %v601, %v639
  %v641 = vpop.f32.mrb[0].mxu0
  %v642 = vpop.f32.mrb[0].mxu0
  %v643 = vpop.f32.mrb[0].mxu0
  %644 = vdwg.mxu0
  %v645 = vmax.f32 %v640, 0.0
  %v646 = vld [vmem:[%s2 + $0x1a0] sm:$0xff]
  %v647 = vld [vmem:[%s2 + $0x1b0] sm:$0xff]
  %v648 = vld [vmem:[%s2 + $0x1c0] sm:$0xff]
  %v649 = vld [vmem:[%s2 + $0x1d0] sm:$0xff]
  %v650 = vpack.c.bf16 %v645, %v645
  %v651 = vpack.c.bf16 %v647, %v646
  %v652 = vpack.c.bf16 %v649, %v648
  %v653 = vld [vmem:[%s2 + $0x1e0] ss:$0 sm:$0xff]
  %v655 = vsel %vm135, %v650, 0
  %657 = vmatprep.subr.bf16.mxu0 0
  %658 = vmatpush1.bf16.msra.mxu0 %v651
  %659 = vmatprep.subr.bf16.mxu0 0
  %660 = vmatpush1.bf16.msra.mxu0 %v652
  %661 = vmatprep.subr.bf16.mxu0 0
  %662 = vmatpush1.bf16.msra.mxu0 0
  %663 = vmatprep.subr.bf16.mxu0 0
  %664 = vmatpush1.bf16.msra.mxu0 0
  %665 = vmatprep.subr.bf16.mxu0 0
  %666 = vmatpush1.bf16.msra.mxu0 0
  %667 = vmatprep.subr.bf16.mxu0 0
  %668 = vmatpush1.bf16.msra.mxu0 0
  %669 = vmatprep.subr.bf16.mxu0 0
  %670 = vmatpush1.bf16.msra.mxu0 0
  %671 = vmatprep.subr.bf16.mxu0 0
  %672 = vmatpush1.bf16.msra.mxu0 0
  %673 = vmatprep.subr.bf16.mxu0 0
  %674 = vmatpush1.bf16.msra.mxu0 0
  %675 = vmatprep.subr.bf16.mxu0 0
  %676 = vmatpush1.bf16.msra.mxu0 0
  %677 = vmatprep.subr.bf16.mxu0 0
  %678 = vmatpush1.bf16.msra.mxu0 0
  %679 = vmatprep.subr.bf16.mxu0 0
  %680 = vmatpush1.bf16.msra.mxu0 0
  %681 = vmatprep.subr.bf16.mxu0 0
  %682 = vmatpush1.bf16.msra.mxu0 0
  %683 = vmatprep.subr.bf16.mxu0 0
  %684 = vmatpush1.bf16.msra.mxu0 0
  %685 = vmatprep.subr.bf16.mxu0 0
  %686 = vmatpush1.bf16.msra.mxu0 0
  %687 = vmatprep.subr.bf16.mxu0 0
  %688 = vmatpush1.bf16.msra.mxu0 0
  %689 = vmatprep.mubr.bf16.mxu0 0
  %690 = vmatmul.mubr.bf16.gmra.mrb[0].mxu0 %v655
  %v691 = vpop.f32.mrb[0].mxu0
  %v692 = vadd.f32 %v653, %v691
  %v693 = vpop.f32.mrb[0].mxu0
  %v694 = vpop.f32.mrb[0].mxu0
  %v695 = vpop.f32.mrb[0].mxu0
  %696 = vdwg.mxu0
  %v697 = vld [vmem:[%s2 + $0x260] sm:$0xff]
  %v698 = vld [vmem:[%s2 + $0x270] sm:$0xff]
  %v699 = vld [vmem:[%s2 + $0x280] sm:$0xff]
  %v700 = vld [vmem:[%s2 + $0x290] sm:$0xff]
  %vm701 = vcmask 15360
  %v703 = vsel %vm701, %v697, 0
  %v706 = vsel %vm701, %v698, 0
  %v709 = vsel %vm701, %v699, 0
  %v712 = vsel %vm701, %v700, 0
  %vm714 = vcmask 1041408
  %v716 = vsel %vm714, %v692, 0
  %718 = vmatprep.subr.mxu0 0.0
  %719 = vmatpush1.msra.mxu0 %v716
  %720 = vmatprep.subr.mxu0 0.0
  %721 = vmatpush1.msra.mxu0 0.0
  %722 = vmatprep.subr.mxu0 0.0
  %723 = vmatpush1.msra.mxu0 0.0
  %724 = vmatprep.subr.mxu0 0.0
  %725 = vmatpush1.msra.mxu0 0.0
  %726 = vmatprep.subr.mxu0 0.0
  %727 = vmatpush1.msra.mxu0 0.0
  %728 = vmatprep.subr.mxu0 0.0
  %729 = vmatpush1.msra.mxu0 0.0
  %730 = vmatprep.subr.mxu0 0.0
  %731 = vmatpush1.msra.mxu0 0.0
  %732 = vmatprep.subr.mxu0 0.0
  %733 = vmatpush1.msra.mxu0 0.0
  %734 = vmatprep.subr.mxu0 0.0
  %735 = vmatpush1.msra.mxu0 0.0
  %736 = vmatprep.subr.mxu0 0.0
  %737 = vmatpush1.msra.mxu0 0.0
  %738 = vmatprep.subr.mxu0 0.0
  %739 = vmatpush1.msra.mxu0 0.0
  %740 = vmatprep.subr.mxu0 0.0
  %741 = vmatpush1.msra.mxu0 0.0
  %742 = vmatprep.subr.mxu0 0.0
  %743 = vmatpush1.msra.mxu0 0.0
  %744 = vmatprep.subr.mxu0 0.0
  %745 = vmatpush1.msra.mxu0 0.0
  %746 = vmatprep.subr.mxu0 0.0
  %747 = vmatpush1.msra.mxu0 0.0
  %748 = vmatprep.subr.mxu0 0.0
  %749 = vmatpush1.msra.mxu0 0.0
  %750 = vmatprep.subr.mxu0 0.0
  %751 = vmatpush1.msra.mxu0 0.0
  %752 = vmatprep.subr.mxu0 0.0
  %753 = vmatpush1.msra.mxu0 0.0
  %754 = vmatprep.subr.mxu0 0.0
  %755 = vmatpush1.msra.mxu0 0.0
  %756 = vmatprep.subr.mxu0 0.0
  %757 = vmatpush1.msra.mxu0 0.0
  %758 = vmatprep.subr.mxu0 0.0
  %759 = vmatpush1.msra.mxu0 0.0
  %760 = vmatprep.subr.mxu0 0.0
  %761 = vmatpush1.msra.mxu0 0.0
  %762 = vmatprep.subr.mxu0 0.0
  %763 = vmatpush1.msra.mxu0 0.0
  %764 = vmatprep.subr.mxu0 0.0
  %765 = vmatpush1.msra.mxu0 0.0
  %766 = vmatprep.subr.mxu0 0.0
  %767 = vmatpush1.msra.mxu0 0.0
  %768 = vmatprep.subr.mxu0 0.0
  %769 = vmatpush1.msra.mxu0 0.0
  %770 = vmatprep.subr.mxu0 0.0
  %771 = vmatpush1.msra.mxu0 0.0
  %772 = vmatprep.subr.mxu0 0.0
  %773 = vmatpush1.msra.mxu0 0.0
  %774 = vmatprep.subr.mxu0 0.0
  %775 = vmatpush1.msra.mxu0 0.0
  %776 = vmatprep.subr.mxu0 0.0
  %777 = vmatpush1.msra.mxu0 0.0
  %778 = vmatprep.subr.mxu0 0.0
  %779 = vmatpush1.msra.mxu0 0.0
  %780 = vmatprep.subr.mxu0 0.0
  %781 = vmatpush1.msra.mxu0 0.0
  %782 = vmatprep.mubr.f32.mxu0 0.0
  %783 = vmatmul.mubr.f32.gmra.mrb[0].mxu0 %v703
  %v784 = vpop.f32.mrb[0].mxu0
  %v785 = vadd.f32 0.0, %v784
  %v786 = vpop.f32.mrb[0].mxu0
  %787 = vmatprep.mubr.f32.mxu0 0.0
  %788 = vmatmul.mubr.f32.gmra.mrb[0].mxu0 %v706
  %v789 = vpop.f32.mrb[0].mxu0
  %v790 = vadd.f32 0.0, %v789
  %v791 = vpop.f32.mrb[0].mxu0
  %792 = vmatprep.mubr.f32.mxu0 0.0
  %793 = vmatmul.mubr.f32.gmra.mrb[0].mxu0 %v709
  %v794 = vpop.f32.mrb[0].mxu0
  %v795 = vadd.f32 0.0, %v794
  %v796 = vpop.f32.mrb[0].mxu0
  %797 = vmatprep.mubr.f32.mxu0 0.0
  %798 = vmatmul.mubr.f32.gmra.mrb[0].mxu0 %v712
  %v799 = vpop.f32.mrb[0].mxu0
  %v800 = vadd.f32 0.0, %v799
  %v801 = vpop.f32.mrb[0].mxu0
  %802 = vdwg.mxu0
  %v803 = vld [vmem:[%s2 + $0x1f0] sm:$0xff]
  %v804 = vld [vmem:[%s2 + $0x200] sm:$0xff]
  %v805 = vld [vmem:[%s2 + $0x210] sm:$0xff]
  %v806 = vld [vmem:[%s2 + $0x220] sm:$0xff]
  %v807 = vpack.c.bf16 %v804, %v803
  %v808 = vpack.c.bf16 %v806, %v805
  %v809 = vld [vmem:[%s2 + $0x230] ss:$0 sm:$0xff]
  %810 = vmatprep.subr.bf16.mxu0 0
  %811 = vmatpush1.bf16.msra.mxu0 %v807
  %812 = vmatprep.subr.bf16.mxu0 0
  %813 = vmatpush1.bf16.msra.mxu0 %v808
  %814 = vmatprep.subr.bf16.mxu0 0
  %815 = vmatpush1.bf16.msra.mxu0 0
  %816 = vmatprep.subr.bf16.mxu0 0
  %817 = vmatpush1.bf16.msra.mxu0 0
  %818 = vmatprep.subr.bf16.mxu0 0
  %819 = vmatpush1.bf16.msra.mxu0 0
  %820 = vmatprep.subr.bf16.mxu0 0
  %821 = vmatpush1.bf16.msra.mxu0 0
  %822 = vmatprep.subr.bf16.mxu0 0
  %823 = vmatpush1.bf16.msra.mxu0 0
  %824 = vmatprep.subr.bf16.mxu0 0
  %825 = vmatpush1.bf16.msra.mxu0 0
  %826 = vmatprep.subr.bf16.mxu0 0
  %827 = vmatpush1.bf16.msra.mxu0 0
  %828 = vmatprep.subr.bf16.mxu0 0
  %829 = vmatpush1.bf16.msra.mxu0 0
  %830 = vmatprep.subr.bf16.mxu0 0
  %831 = vmatpush1.bf16.msra.mxu0 0
  %832 = vmatprep.subr.bf16.mxu0 0
  %833 = vmatpush1.bf16.msra.mxu0 0
  %834 = vmatprep.subr.bf16.mxu0 0
  %835 = vmatpush1.bf16.msra.mxu0 0
  %836 = vmatprep.subr.bf16.mxu0 0
  %837 = vmatpush1.bf16.msra.mxu0 0
  %838 = vmatprep.subr.bf16.mxu0 0
  %839 = vmatpush1.bf16.msra.mxu0 0
  %840 = vmatprep.subr.bf16.mxu0 0
  %841 = vmatpush1.bf16.msra.mxu0 0
  %842 = vmatprep.mubr.bf16.mxu0 0
  %843 = vmatmul.mubr.bf16.gmra.mrb[0].mxu0 %v278
  %v844 = vpop.f32.mrb[0].mxu0
  %v845 = vadd.f32 %v809, %v844
  %v846 = vpop.f32.mrb[0].mxu0
  %v847 = vpop.f32.mrb[0].mxu0
  %v848 = vadd.f32 %v809, %v847
  %v849 = vpop.f32.mrb[0].mxu0
  %850 = vmatprep.mubr.bf16.mxu0 0
  %851 = vmatmul.mubr.bf16.gmra.mrb[0].mxu0 %v281
  %v852 = vpop.f32.mrb[0].mxu0
  %v853 = vadd.f32 %v809, %v852
  %v854 = vpop.f32.mrb[0].mxu0
  %v855 = vpop.f32.mrb[0].mxu0
  %v856 = vadd.f32 %v809, %v855
  %v857 = vpop.f32.mrb[0].mxu0
  %858 = vdwg.mxu0
  %v859 = vmul.f32 %v845, %v845
  %v860 = vmul.f32 %v848, %v848
  %v861 = vmul.f32 %v853, %v853
  %v862 = vmul.f32 %v856, %v856
  %v863 = vmul.f32 %v845, %v859
  %v864 = vmul.f32 %v848, %v860
  %v865 = vmul.f32 %v853, %v861
  %v866 = vmul.f32 %v856, %v862
  %v867 = vmul.f32 %v863, 0.044715
  %v868 = vmul.f32 %v864, 0.044715
  %v869 = vmul.f32 %v865, 0.044715
  %v870 = vmul.f32 %v866, 0.044715
  %v871 = vadd.f32 %v845, %v867
  %v872 = vadd.f32 %v848, %v868
  %v873 = vadd.f32 %v853, %v869
  %v874 = vadd.f32 %v856, %v870
  %v875 = vmul.f32 %v871, 0.7978846
  %v876 = vmul.f32 %v872, 0.7978846
  %v877 = vmul.f32 %v873, 0.7978846
  %v878 = vmul.f32 %v874, 0.7978846
  %v879 = vtanh.pop %v875
  %v880 = vtanh.pop %v876
  %v881 = vtanh.pop %v877
  %v882 = vtanh.pop %v878
  %v883 = vadd.f32 %v879, 1.0
  %v884 = vadd.f32 %v880, 1.0
  %v885 = vadd.f32 %v881, 1.0
  %v886 = vadd.f32 %v882, 1.0
  %v887 = vmul.f32 %v883, 0.5
  %v888 = vmul.f32 %v884, 0.5
  %v889 = vmul.f32 %v885, 0.5
  %v890 = vmul.f32 %v886, 0.5
  %v891 = vmul.f32 %v845, %v887
  %v892 = vmul.f32 %v848, %v888
  %v893 = vmul.f32 %v853, %v889
  %v894 = vmul.f32 %v856, %v890
  %v895 = vmul.f32 %v891, %v785
  %v896 = vmul.f32 %v892, %v790
  %v897 = vmul.f32 %v893, %v795
  %v898 = vmul.f32 %v894, %v800
  %v899 = vld [vmem:[%s2 + $0x2b0] sm:$0xff]
  %v900 = vld [vmem:[%s2 + $0x2c0] sm:$0xff]
  %v901 = vld [vmem:[%s2 + $0x2d0] sm:$0xff]
  %v902 = vld [vmem:[%s2 + $0x2e0] sm:$0xff]
  %v903 = vld [vmem:[%s2 + $0x2f0] sm:$0xff]
  %v904 = vld [vmem:[%s2 + $0x300] sm:$0xff]
  %v905 = vld [vmem:[%s2 + $0x310] sm:$0xff]
  %v906 = vld [vmem:[%s2 + $0x320] sm:$0xff]
  %v907 = vld [vmem:[%s2 + $0x330] sm:$0xff]
  %v908 = vld [vmem:[%s2 + $0x340] sm:$0xff]
  %v909 = vld [vmem:[%s2 + $0x350] sm:$0xff]
  %v910 = vld [vmem:[%s2 + $0x360] sm:$0xff]
  %v911 = vld [vmem:[%s2 + $0x370] sm:$0xff]
  %v912 = vld [vmem:[%s2 + $0x380] sm:$0xff]
  %v913 = vld [vmem:[%s2 + $0x390] sm:$0xff]
  %v914 = vld [vmem:[%s2 + $0x3a0] sm:$0xff]
  %915 = vmatprep.subr.mxu0 0.0
  %916 = vmatpush1.msra.mxu0 %v899
  %917 = vmatprep.subr.mxu0 0.0
  %918 = vmatpush1.msra.mxu0 %v900
  %919 = vmatprep.subr.mxu0 0.0
  %920 = vmatpush1.msra.mxu0 %v901
  %921 = vmatprep.subr.mxu0 0.0
  %922 = vmatpush1.msra.mxu0 %v902
  %923 = vmatprep.subr.mxu0 0.0
  %924 = vmatpush1.msra.mxu0 %v903
  %925 = vmatprep.subr.mxu0 0.0
  %926 = vmatpush1.msra.mxu0 %v904
  %927 = vmatprep.subr.mxu0 0.0
  %928 = vmatpush1.msra.mxu0 %v905
  %929 = vmatprep.subr.mxu0 0.0
  %930 = vmatpush1.msra.mxu0 %v906
  %931 = vmatprep.subr.mxu0 0.0
  %932 = vmatpush1.msra.mxu0 %v907
  %933 = vmatprep.subr.mxu0 0.0
  %934 = vmatpush1.msra.mxu0 %v908
  %935 = vmatprep.subr.mxu0 0.0
  %936 = vmatpush1.msra.mxu0 %v909
  %937 = vmatprep.subr.mxu0 0.0
  %938 = vmatpush1.msra.mxu0 %v910
  %939 = vmatprep.subr.mxu0 0.0
  %940 = vmatpush1.msra.mxu0 %v911
  %941 = vmatprep.subr.mxu0 0.0
  %942 = vmatpush1.msra.mxu0 %v912
  %943 = vmatprep.subr.mxu0 0.0
  %944 = vmatpush1.msra.mxu0 %v913
  %945 = vmatprep.subr.mxu0 0.0
  %946 = vmatpush1.msra.mxu0 %v914
  %947 = vmatprep.subr.mxu0 0.0
  %948 = vmatpush1.msra.mxu0 0.0
  %949 = vmatprep.subr.mxu0 0.0
  %950 = vmatpush1.msra.mxu0 0.0
  %951 = vmatprep.subr.mxu0 0.0
  %952 = vmatpush1.msra.mxu0 0.0
  %953 = vmatprep.subr.mxu0 0.0
  %954 = vmatpush1.msra.mxu0 0.0
  %955 = vmatprep.subr.mxu0 0.0
  %956 = vmatpush1.msra.mxu0 0.0
  %957 = vmatprep.subr.mxu0 0.0
  %958 = vmatpush1.msra.mxu0 0.0
  %959 = vmatprep.subr.mxu0 0.0
  %960 = vmatpush1.msra.mxu0 0.0
  %961 = vmatprep.subr.mxu0 0.0
  %962 = vmatpush1.msra.mxu0 0.0
  %963 = vmatprep.subr.mxu0 0.0
  %964 = vmatpush1.msra.mxu0 0.0
  %965 = vmatprep.subr.mxu0 0.0
  %966 = vmatpush1.msra.mxu0 0.0
  %967 = vmatprep.subr.mxu0 0.0
  %968 = vmatpush1.msra.mxu0 0.0
  %969 = vmatprep.subr.mxu0 0.0
  %970 = vmatpush1.msra.mxu0 0.0
  %971 = vmatprep.subr.mxu0 0.0
  %972 = vmatpush1.msra.mxu0 0.0
  %973 = vmatprep.subr.mxu0 0.0
  %974 = vmatpush1.msra.mxu0 0.0
  %975 = vmatprep.subr.mxu0 0.0
  %976 = vmatpush1.msra.mxu0 0.0
  %977 = vmatprep.subr.mxu0 0.0
  %978 = vmatpush1.msra.mxu0 0.0
  %979 = vmatprep.mubr.f32.mxu0 0.0
  %980 = vmatmul.mubr.f32.gmra.mrb[0].mxu0 %v895
  %v981 = vpop.f32.mrb[0].mxu0
  %v982 = vadd.f32 0.0, %v981
  %v983 = vpop.f32.mrb[0].mxu0
  %984 = vmatprep.mubr.f32.mxu0 0.0
  %985 = vmatmul.mubr.f32.gmra.mrb[0].mxu0 %v896
  %v986 = vpop.f32.mrb[0].mxu0
  %v987 = vadd.f32 0.0, %v986
  %v988 = vpop.f32.mrb[0].mxu0
  %989 = vmatprep.mubr.f32.mxu0 0.0
  %990 = vmatmul.mubr.f32.gmra.mrb[0].mxu0 %v897
  %v991 = vpop.f32.mrb[0].mxu0
  %v992 = vadd.f32 0.0, %v991
  %v993 = vpop.f32.mrb[0].mxu0
  %994 = vmatprep.mubr.f32.mxu0 0.0
  %995 = vmatmul.mubr.f32.gmra.mrb[0].mxu0 %v898
  %v996 = vpop.f32.mrb[0].mxu0
  %v997 = vadd.f32 0.0, %v996
  %v998 = vpop.f32.mrb[0].mxu0
  %999 = vdwg.mxu0
  %v1000 = vxor.u32 %v982, 2147483648
  %v1001 = vxor.u32 %v987, 2147483648
  %v1002 = vxor.u32 %v992, 2147483648
  %v1003 = vxor.u32 %v997, 2147483648
  %v1004 = vmul.f32 %v1000, 1.442695
  %v1005 = vpow.pop %v1004
  %v1006 = vmul.f32 %v1001, 1.442695
  %v1007 = vpow.pop %v1006
  %v1008 = vmul.f32 %v1002, 1.442695
  %v1009 = vpow.pop %v1008
  %v1010 = vmul.f32 %v1003, 1.442695
  %v1011 = vpow.pop %v1010
  %v1012 = vadd.f32 %v1005, 1.0
  %v1013 = vadd.f32 %v1007, 1.0
  %v1014 = vadd.f32 %v1009, 1.0
  %v1015 = vadd.f32 %v1011, 1.0
  %v1016 = vrcp.pop %v1012
  %v1017 = vmul.f32 1.0, %v1016
  %v1018 = vrcp.pop %v1013
  %v1019 = vmul.f32 1.0, %v1018
  %v1020 = vrcp.pop %v1014
  %v1021 = vmul.f32 1.0, %v1020
  %v1022 = vrcp.pop %v1015
  %v1023 = vmul.f32 1.0, %v1022
  %v1024 = vld [vmem:[%s2 + $0x3b0] sm:$0xff]
  %v1025 = vld [vmem:[%s2 + $0x3b8] sm:$0xff]
  %v1026 = vld [vmem:[%s2 + $0x3c0] sm:$0xff]
  %v1027 = vld [vmem:[%s2 + $0x3c8] sm:$0xff]
  %vm1028 = vcmask 130048
  %v1030 = vsel %vm1028, %v1017, 0
  %v1033 = vsel %vm1028, %v1019, 0
  %v1036 = vsel %vm1028, %v1021, 0
  %v1039 = vsel %vm1028, %v1023, 0
  %1041 = vmatprep.subr.mxu0 %v1025
  %1042 = vmatpush1.msra.mxu0 %v1024
  %1043 = vmatprep.subr.mxu0 %v1027
  %1044 = vmatpush1.msra.mxu0 %v1026
  %1045 = vmatprep.subr.mxu0 0.0
  %1046 = vmatpush1.msra.mxu0 0.0
  %1047 = vmatprep.subr.mxu0 0.0
  %1048 = vmatpush1.msra.mxu0 0.0
  %1049 = vmatprep.subr.mxu0 0.0
  %1050 = vmatpush1.msra.mxu0 0.0
  %1051 = vmatprep.subr.mxu0 0.0
  %1052 = vmatpush1.msra.mxu0 0.0
  %1053 = vmatprep.subr.mxu0 0.0
  %1054 = vmatpush1.msra.mxu0 0.0
  %1055 = vmatprep.subr.mxu0 0.0
  %1056 = vmatpush1.msra.mxu0 0.0
  %1057 = vmatprep.subr.mxu0 0.0
  %1058 = vmatpush1.msra.mxu0 0.0
  %1059 = vmatprep.subr.mxu0 0.0
  %1060 = vmatpush1.msra.mxu0 0.0
  %1061 = vmatprep.subr.mxu0 0.0
  %1062 = vmatpush1.msra.mxu0 0.0
  %1063 = vmatprep.subr.mxu0 0.0
  %1064 = vmatpush1.msra.mxu0 0.0
  %1065 = vmatprep.subr.mxu0 0.0
  %1066 = vmatpush1.msra.mxu0 0.0
  %1067 = vmatprep.subr.mxu0 0.0
  %1068 = vmatpush1.msra.mxu0 0.0
  %1069 = vmatprep.subr.mxu0 0.0
  %1070 = vmatpush1.msra.mxu0 0.0
  %1071 = vmatprep.subr.mxu0 0.0
  %1072 = vmatpush1.msra.mxu0 0.0
  %1073 = vmatprep.subr.mxu0 0.0
  %1074 = vmatpush1.msra.mxu0 0.0
  %1075 = vmatprep.subr.mxu0 0.0
  %1076 = vmatpush1.msra.mxu0 0.0
  %1077 = vmatprep.subr.mxu0 0.0
  %1078 = vmatpush1.msra.mxu0 0.0
  %1079 = vmatprep.subr.mxu0 0.0
  %1080 = vmatpush1.msra.mxu0 0.0
  %1081 = vmatprep.subr.mxu0 0.0
  %1082 = vmatpush1.msra.mxu0 0.0
  %1083 = vmatprep.subr.mxu0 0.0
  %1084 = vmatpush1.msra.mxu0 0.0
  %1085 = vmatprep.subr.mxu0 0.0
  %1086 = vmatpush1.msra.mxu0 0.0
  %1087 = vmatprep.subr.mxu0 0.0
  %1088 = vmatpush1.msra.mxu0 0.0
  %1089 = vmatprep.subr.mxu0 0.0
  %1090 = vmatpush1.msra.mxu0 0.0
  %1091 = vmatprep.subr.mxu0 0.0
  %1092 = vmatpush1.msra.mxu0 0.0
  %1093 = vmatprep.subr.mxu0 0.0
  %1094 = vmatpush1.msra.mxu0 0.0
  %1095 = vmatprep.subr.mxu0 0.0
  %1096 = vmatpush1.msra.mxu0 0.0
  %1097 = vmatprep.subr.mxu0 0.0
  %1098 = vmatpush1.msra.mxu0 0.0
  %1099 = vmatprep.subr.mxu0 0.0
  %1100 = vmatpush1.msra.mxu0 0.0
  %1101 = vmatprep.subr.mxu0 0.0
  %1102 = vmatpush1.msra.mxu0 0.0
  %1103 = vmatprep.subr.mxu0 0.0
  %1104 = vmatpush1.msra.mxu0 0.0
  %1105 = vmatprep.mubr.f32.mxu0 0.0
  %1106 = vmatmul.mubr.f32.gmra.mrb[0].mxu0 %v1030
  %v1107 = vpop.f32.mrb[0].mxu0
  %v1108 = vadd.f32 0.0, %v1107
  %v1109 = vpop.f32.mrb[0].mxu0
  %v1110 = vadd.f32 0.0, %v1109
  %1111 = vmatprep.mubr.f32.mxu0 0.0
  %1112 = vmatmul.mubr.f32.gmra.mrb[0].mxu0 %v1033
  %v1113 = vpop.f32.mrb[0].mxu0
  %v1114 = vadd.f32 0.0, %v1113
  %v1115 = vpop.f32.mrb[0].mxu0
  %v1116 = vadd.f32 0.0, %v1115
  %1117 = vmatprep.mubr.f32.mxu0 0.0
  %1118 = vmatmul.mubr.f32.gmra.mrb[0].mxu0 %v1036
  %v1119 = vpop.f32.mrb[0].mxu0
  %v1120 = vadd.f32 0.0, %v1119
  %v1121 = vpop.f32.mrb[0].mxu0
  %v1122 = vadd.f32 0.0, %v1121
  %1123 = vmatprep.mubr.f32.mxu0 0.0
  %1124 = vmatmul.mubr.f32.gmra.mrb[0].mxu0 %v1039
  %v1125 = vpop.f32.mrb[0].mxu0
  %v1126 = vadd.f32 0.0, %v1125
  %v1127 = vpop.f32.mrb[0].mxu0
  %v1128 = vadd.f32 0.0, %v1127
  %1129 = vdwg.mxu0
  %v1130 = vld [vmem:[%s2 + $0x2a0] sm:$0x3]
  %v1131 = vld [vmem:[%s2 + $0x3d0] sm:$0xff]
  %v1132 = vld [vmem:[%s2 + $0x3d8] sm:$0xff]
  %v1133 = vld [vmem:[%s2 + $0x3e0] sm:$0xff]
  %v1134 = vld [vmem:[%s2 + $0x3e8] sm:$0xff]
  %v1135 = vld [vmem:[%s2 + $0x3f0] sm:$0xff]
  %v1136 = vld [vmem:[%s2 + $0x3f8] sm:$0xff]
  %v1137 = vld [vmem:[%s2 + $0x400] sm:$0xff]
  %v1138 = vld [vmem:[%s2 + $0x408] sm:$0xff]
  %v1139 = vmul.f32 %v1108, %v1131
  %v1140 = vmul.f32 %v1110, %v1132
  %v1141 = vmul.f32 %v1114, %v1133
  %v1142 = vmul.f32 %v1116, %v1134
  %v1143 = vmul.f32 %v1120, %v1135
  %v1144 = vmul.f32 %v1122, %v1136
  %v1145 = vmul.f32 %v1126, %v1137
  %v1146 = vmul.f32 %v1128, %v1138
  %v1148 = vsel %vm135, %v1130, 0
  %1150 = vmatprep.subr.mxu0 %v1140
  %1151 = vmatpush1.msra.mxu0 %v1139
  %1152 = vmatprep.subr.mxu0 %v1142
  %1153 = vmatpush1.msra.mxu0 %v1141
  %1154 = vmatprep.subr.mxu0 %v1144
  %1155 = vmatpush1.msra.mxu0 %v1143
  %1156 = vmatprep.subr.mxu0 %v1146
  %1157 = vmatpush1.msra.mxu0 %v1145
  %1158 = vmatprep.subr.mxu0 0.0
  %1159 = vmatpush1.msra.mxu0 0.0
  %1160 = vmatprep.subr.mxu0 0.0
  %1161 = vmatpush1.msra.mxu0 0.0
  %1162 = vmatprep.subr.mxu0 0.0
  %1163 = vmatpush1.msra.mxu0 0.0
  %1164 = vmatprep.subr.mxu0 0.0
  %1165 = vmatpush1.msra.mxu0 0.0
  %1166 = vmatprep.subr.mxu0 0.0
  %1167 = vmatpush1.msra.mxu0 0.0
  %1168 = vmatprep.subr.mxu0 0.0
  %1169 = vmatpush1.msra.mxu0 0.0
  %1170 = vmatprep.subr.mxu0 0.0
  %1171 = vmatpush1.msra.mxu0 0.0
  %1172 = vmatprep.subr.mxu0 0.0
  %1173 = vmatpush1.msra.mxu0 0.0
  %1174 = vmatprep.subr.mxu0 0.0
  %1175 = vmatpush1.msra.mxu0 0.0
  %1176 = vmatprep.subr.mxu0 0.0
  %1177 = vmatpush1.msra.mxu0 0.0
  %1178 = vmatprep.subr.mxu0 0.0
  %1179 = vmatpush1.msra.mxu0 0.0
  %1180 = vmatprep.subr.mxu0 0.0
  %1181 = vmatpush1.msra.mxu0 0.0
  %1182 = vmatprep.subr.mxu0 0.0
  %1183 = vmatpush1.msra.mxu0 0.0
  %1184 = vmatprep.subr.mxu0 0.0
  %1185 = vmatpush1.msra.mxu0 0.0
  %1186 = vmatprep.subr.mxu0 0.0
  %1187 = vmatpush1.msra.mxu0 0.0
  %1188 = vmatprep.subr.mxu0 0.0
  %1189 = vmatpush1.msra.mxu0 0.0
  %1190 = vmatprep.subr.mxu0 0.0
  %1191 = vmatpush1.msra.mxu0 0.0
  %1192 = vmatprep.subr.mxu0 0.0
  %1193 = vmatpush1.msra.mxu0 0.0
  %1194 = vmatprep.subr.mxu0 0.0
  %1195 = vmatpush1.msra.mxu0 0.0
  %1196 = vmatprep.subr.mxu0 0.0
  %1197 = vmatpush1.msra.mxu0 0.0
  %1198 = vmatprep.subr.mxu0 0.0
  %1199 = vmatpush1.msra.mxu0 0.0
  %1200 = vmatprep.subr.mxu0 0.0
  %1201 = vmatpush1.msra.mxu0 0.0
  %1202 = vmatprep.subr.mxu0 0.0
  %1203 = vmatpush1.msra.mxu0 0.0
  %1204 = vmatprep.subr.mxu0 0.0
  %1205 = vmatpush1.msra.mxu0 0.0
  %1206 = vmatprep.subr.mxu0 0.0
  %1207 = vmatpush1.msra.mxu0 0.0
  %1208 = vmatprep.subr.mxu0 0.0
  %1209 = vmatpush1.msra.mxu0 0.0
  %1210 = vmatprep.subr.mxu0 0.0
  %1211 = vmatpush1.msra.mxu0 0.0
  %1212 = vmatprep.subr.mxu0 0.0
  %1213 = vmatpush1.msra.mxu0 0.0
  %1214 = vmatprep.mubr.f32.mxu0 0.0
  %1215 = vmatmul.mubr.f32.gmra.mrb[0].mxu0 %v1148
  %v1216 = vpop.f32.mrb[0].mxu0
  %v1217 = vadd.f32 0.0, %v1216
  %v1218 = vpop.f32.mrb[0].mxu0
  %v1219 = vadd.f32 0.0, %v1218
  %1220 = vdwg.mxu0
  %v1221 = vld [vmem:[%s3] sm:$0xff]
  %v1222 = vld [vmem:[%s3 + $0x8] sm:$0xff]
  %v1223 = vld [vmem:[%s3 + $0x10] sm:$0xff]
  %v1224 = vld [vmem:[%s3 + $0x18] sm:$0xff]
  %v1225 = vld [vmem:[%s3 + $0x20] sm:$0xff]
  %v1226 = vld [vmem:[%s3 + $0x28] sm:$0xff]
  %v1227 = vld [vmem:[%s3 + $0x30] sm:$0xff]
  %v1228 = vld [vmem:[%s3 + $0x38] sm:$0xff]
  %v1229 = vld [vmem:[%s3 + $0x40] sm:$0xff]
  %v1230 = vld [vmem:[%s3 + $0x48] sm:$0xff]
  %v1231 = vld [vmem:[%s3 + $0x50] sm:$0xff]
  %v1232 = vld [vmem:[%s3 + $0x58] sm:$0xff]
  %v1233 = vld [vmem:[%s3 + $0x60] sm:$0xff]
  %v1234 = vld [vmem:[%s3 + $0x68] sm:$0xff]
  %v1235 = vld [vmem:[%s3 + $0x70] sm:$0xff]
  %v1236 = vld [vmem:[%s3 + $0x78] sm:$0xff]
  %v1237 = vld [vmem:[%s3 + $0x80] sm:$0xff]
  %v1238 = vld [vmem:[%s3 + $0x88] sm:$0xff]
  %v1239 = vld [vmem:[%s3 + $0x90] sm:$0xff]
  %v1240 = vld [vmem:[%s3 + $0x98] sm:$0xff]
  %v1241 = vld [vmem:[%s3 + $0xa0] sm:$0xff]
  %v1242 = vld [vmem:[%s3 + $0xa8] sm:$0xff]
  %v1243 = vld [vmem:[%s3 + $0xb0] sm:$0xff]
  %v1244 = vld [vmem:[%s3 + $0xb8] sm:$0xff]
  %v1245 = vld [vmem:[%s3 + $0xc0] sm:$0xff]
  %v1246 = vld [vmem:[%s3 + $0xc8] sm:$0xff]
  %v1247 = vld [vmem:[%s3 + $0xd0] sm:$0xff]
  %v1248 = vld [vmem:[%s3 + $0xd8] sm:$0xff]
  %v1249 = vld [vmem:[%s3 + $0xe0] sm:$0xff]
  %v1250 = vld [vmem:[%s3 + $0xe8] sm:$0xff]
  %v1251 = vld [vmem:[%s3 + $0xf0] sm:$0xff]
  %v1252 = vld [vmem:[%s3 + $0xf8] sm:$0xff]
  %v1253 = vld [vmem:[%s3 + $0x100] sm:$0xff]
  %v1254 = vld [vmem:[%s3 + $0x108] sm:$0xff]
  %v1255 = vld [vmem:[%s3 + $0x110] sm:$0xff]
  %v1256 = vld [vmem:[%s3 + $0x118] sm:$0xff]
  %v1257 = vld [vmem:[%s3 + $0x120] sm:$0xff]
  %v1258 = vld [vmem:[%s3 + $0x128] sm:$0xff]
  %v1259 = vld [vmem:[%s3 + $0x130] sm:$0xff]
  %v1260 = vld [vmem:[%s3 + $0x138] sm:$0xff]
  %v1261 = vld [vmem:[%s3 + $0x140] sm:$0xff]
  %v1262 = vld [vmem:[%s3 + $0x148] sm:$0xff]
  %v1263 = vld [vmem:[%s3 + $0x150] sm:$0xff]
  %v1264 = vld [vmem:[%s3 + $0x158] sm:$0xff]
  %v1265 = vld [vmem:[%s3 + $0x160] sm:$0xff]
  %v1266 = vld [vmem:[%s3 + $0x168] sm:$0xff]
  %v1267 = vld [vmem:[%s3 + $0x170] sm:$0xff]
  %v1268 = vld [vmem:[%s3 + $0x178] sm:$0xff]
  %v1269 = vld [vmem:[%s3 + $0x180] sm:$0xff]
  %v1270 = vld [vmem:[%s3 + $0x188] sm:$0xff]
  %v1271 = vld [vmem:[%s3 + $0x190] sm:$0xff]
  %v1272 = vld [vmem:[%s3 + $0x198] sm:$0xff]
  %v1273 = vld [vmem:[%s3 + $0x1a0] sm:$0xff]
  %v1274 = vld [vmem:[%s3 + $0x1a8] sm:$0xff]
  %v1275 = vld [vmem:[%s3 + $0x1b0] sm:$0xff]
  %v1276 = vld [vmem:[%s3 + $0x1b8] sm:$0xff]
  %v1277 = vld [vmem:[%s3 + $0x1c0] sm:$0xff]
  %v1278 = vld [vmem:[%s3 + $0x1c8] sm:$0xff]
  %v1279 = vld [vmem:[%s3 + $0x1d0] sm:$0xff]
  %v1280 = vld [vmem:[%s3 + $0x1d8] sm:$0xff]
  %v1281 = vld [vmem:[%s3 + $0x1e0] sm:$0xff]
  %v1282 = vld [vmem:[%s3 + $0x1e8] sm:$0xff]
  %v1283 = vld [vmem:[%s3 + $0x1f0] sm:$0xff]
  %v1284 = vld [vmem:[%s3 + $0x1f8] sm:$0xff]
  %v1285 = vld [vmem:[%s3 + $0x200] sm:$0xff]
  %v1286 = vld [vmem:[%s3 + $0x208] sm:$0xff]
  %v1287 = vld [vmem:[%s3 + $0x210] sm:$0xff]
  %v1288 = vld [vmem:[%s3 + $0x218] sm:$0xff]
  %v1289 = vld [vmem:[%s3 + $0x220] sm:$0xff]
  %v1290 = vld [vmem:[%s3 + $0x228] sm:$0xff]
  %v1291 = vld [vmem:[%s3 + $0x230] sm:$0xff]
  %v1292 = vld [vmem:[%s3 + $0x238] sm:$0xff]
  %v1293 = vld [vmem:[%s3 + $0x240] sm:$0xff]
  %v1294 = vld [vmem:[%s3 + $0x248] sm:$0xff]
  %v1295 = vld [vmem:[%s3 + $0x250] sm:$0xff]
  %v1296 = vld [vmem:[%s3 + $0x258] sm:$0xff]
  %v1297 = vld [vmem:[%s3 + $0x260] sm:$0xff]
  %v1298 = vld [vmem:[%s3 + $0x268] sm:$0xff]
  %v1299 = vld [vmem:[%s3 + $0x270] sm:$0xff]
  %v1300 = vld [vmem:[%s3 + $0x278] sm:$0xff]
  %v1301 = vld [vmem:[%s3 + $0x280] sm:$0xff]
  %v1302 = vld [vmem:[%s3 + $0x288] sm:$0xff]
  %v1303 = vld [vmem:[%s3 + $0x290] sm:$0xff]
  %v1304 = vld [vmem:[%s3 + $0x298] sm:$0xff]
  %v1305 = vld [vmem:[%s3 + $0x2a0] sm:$0xff]
  %v1306 = vld [vmem:[%s3 + $0x2a8] sm:$0xff]
  %v1307 = vld [vmem:[%s3 + $0x2b0] sm:$0xff]
  %v1308 = vld [vmem:[%s3 + $0x2b8] sm:$0xff]
  %v1309 = vld [vmem:[%s3 + $0x2c0] sm:$0xff]
  %v1310 = vld [vmem:[%s3 + $0x2c8] sm:$0xff]
  %v1311 = vld [vmem:[%s3 + $0x2d0] sm:$0xff]
  %v1312 = vld [vmem:[%s3 + $0x2d8] sm:$0xff]
  %v1313 = vld [vmem:[%s3 + $0x2e0] sm:$0xff]
  %v1314 = vld [vmem:[%s3 + $0x2e8] sm:$0xff]
  %v1315 = vld [vmem:[%s3 + $0x2f0] sm:$0xff]
  %v1316 = vld [vmem:[%s3 + $0x2f8] sm:$0xff]
  %v1317 = vld [vmem:[%s3 + $0x300] sm:$0xff]
  %v1318 = vld [vmem:[%s3 + $0x308] sm:$0xff]
  %v1319 = vld [vmem:[%s3 + $0x310] sm:$0xff]
  %v1320 = vld [vmem:[%s3 + $0x318] sm:$0xff]
  %v1321 = vld [vmem:[%s3 + $0x320] sm:$0xff]
  %v1322 = vld [vmem:[%s3 + $0x328] sm:$0xff]
  %v1323 = vld [vmem:[%s3 + $0x330] sm:$0xff]
  %v1324 = vld [vmem:[%s3 + $0x338] sm:$0xff]
  %v1325 = vld [vmem:[%s3 + $0x340] sm:$0xff]
  %v1326 = vld [vmem:[%s3 + $0x348] sm:$0xff]
  %v1327 = vld [vmem:[%s3 + $0x350] sm:$0xff]
  %v1328 = vld [vmem:[%s3 + $0x358] sm:$0xff]
  %v1329 = vld [vmem:[%s3 + $0x360] sm:$0xff]
  %v1330 = vld [vmem:[%s3 + $0x368] sm:$0xff]
  %v1331 = vld [vmem:[%s3 + $0x370] sm:$0xff]
  %v1332 = vld [vmem:[%s3 + $0x378] sm:$0xff]
  %v1333 = vld [vmem:[%s3 + $0x380] sm:$0xff]
  %v1334 = vld [vmem:[%s3 + $0x388] sm:$0xff]
  %v1335 = vld [vmem:[%s3 + $0x390] sm:$0xff]
  %v1336 = vld [vmem:[%s3 + $0x398] sm:$0xff]
  %v1337 = vld [vmem:[%s3 + $0x3a0] sm:$0xff]
  %v1338 = vld [vmem:[%s3 + $0x3a8] sm:$0xff]
  %v1339 = vld [vmem:[%s3 + $0x3b0] sm:$0xff]
  %v1340 = vld [vmem:[%s3 + $0x3b8] sm:$0xff]
  %v1341 = vld [vmem:[%s3 + $0x3c0] sm:$0xff]
  %v1342 = vld [vmem:[%s3 + $0x3c8] sm:$0xff]
  %v1343 = vld [vmem:[%s3 + $0x3d0] sm:$0xff]
  %v1344 = vld [vmem:[%s3 + $0x3d8] sm:$0xff]
  %v1345 = vld [vmem:[%s3 + $0x3e0] sm:$0xff]
  %v1346 = vld [vmem:[%s3 + $0x3e8] sm:$0xff]
  %v1347 = vld [vmem:[%s3 + $0x3f0] sm:$0xff]
  %v1348 = vld [vmem:[%s3 + $0x3f8] sm:$0xff]
  %v1349 = vld [vmem:[%s3 + $0x400] sm:$0xff]
  %v1350 = vld [vmem:[%s3 + $0x408] sm:$0xff]
  %v1351 = vld [vmem:[%s3 + $0x410] sm:$0xff]
  %v1352 = vld [vmem:[%s3 + $0x418] sm:$0xff]
  %v1353 = vld [vmem:[%s3 + $0x420] sm:$0xff]
  %v1354 = vld [vmem:[%s3 + $0x428] sm:$0xff]
  %v1355 = vld [vmem:[%s3 + $0x430] sm:$0xff]
  %v1356 = vld [vmem:[%s3 + $0x438] sm:$0xff]
  %v1357 = vld [vmem:[%s3 + $0x440] sm:$0xff]
  %v1358 = vld [vmem:[%s3 + $0x448] sm:$0xff]
  %v1359 = vld [vmem:[%s3 + $0x450] sm:$0xff]
  %v1360 = vld [vmem:[%s3 + $0x458] sm:$0xff]
  %v1361 = vld [vmem:[%s3 + $0x460] sm:$0xff]
  %v1362 = vld [vmem:[%s3 + $0x468] sm:$0xff]
  %v1363 = vld [vmem:[%s3 + $0x470] sm:$0xff]
  %v1364 = vld [vmem:[%s3 + $0x478] sm:$0xff]
  %v1365 = vld [vmem:[%s3 + $0x480] sm:$0xff]
  %v1366 = vld [vmem:[%s3 + $0x488] sm:$0xff]
  %v1367 = vld [vmem:[%s3 + $0x490] sm:$0xff]
  %v1368 = vld [vmem:[%s3 + $0x498] sm:$0xff]
  %v1369 = vld [vmem:[%s3 + $0x4a0] sm:$0xff]
  %v1370 = vld [vmem:[%s3 + $0x4a8] sm:$0xff]
  %v1371 = vld [vmem:[%s3 + $0x4b0] sm:$0xff]
  %v1372 = vld [vmem:[%s3 + $0x4b8] sm:$0xff]
  %v1373 = vld [vmem:[%s3 + $0x4c0] sm:$0xff]
  %v1374 = vld [vmem:[%s3 + $0x4c8] sm:$0xff]
  %v1375 = vld [vmem:[%s3 + $0x4d0] sm:$0xff]
  %v1376 = vld [vmem:[%s3 + $0x4d8] sm:$0xff]
  %v1377 = vld [vmem:[%s3 + $0x4e0] sm:$0xff]
  %v1378 = vld [vmem:[%s3 + $0x4e8] sm:$0xff]
  %v1379 = vld [vmem:[%s3 + $0x4f0] sm:$0xff]
  %v1380 = vld [vmem:[%s3 + $0x4f8] sm:$0xff]
  %1381 = vmatprep.subr.mxu0 %v1222
  %1382 = vmatpush1.msra.mxu0 %v1221
  %1383 = vmatprep.subr.mxu0 %v1227
  %1384 = vmatpush1.msra.mxu0 %v1226
  %1385 = vmatprep.subr.mxu0 %v1232
  %1386 = vmatpush1.msra.mxu0 %v1231
  %1387 = vmatprep.subr.mxu0 %v1237
  %1388 = vmatpush1.msra.mxu0 %v1236
  %1389 = vmatprep.subr.mxu0 %v1242
  %1390 = vmatpush1.msra.mxu0 %v1241
  %1391 = vmatprep.subr.mxu0 %v1247
  %1392 = vmatpush1.msra.mxu0 %v1246
  %1393 = vmatprep.subr.mxu0 %v1252
  %1394 = vmatpush1.msra.mxu0 %v1251
  %1395 = vmatprep.subr.mxu0 %v1257
  %1396 = vmatpush1.msra.mxu0 %v1256
  %1397 = vmatprep.subr.mxu0 %v1262
  %1398 = vmatpush1.msra.mxu0 %v1261
  %1399 = vmatprep.subr.mxu0 %v1267
  %1400 = vmatpush1.msra.mxu0 %v1266
  %1401 = vmatprep.subr.mxu0 %v1272
  %1402 = vmatpush1.msra.mxu0 %v1271
  %1403 = vmatprep.subr.mxu0 %v1277
  %1404 = vmatpush1.msra.mxu0 %v1276
  %1405 = vmatprep.subr.mxu0 %v1282
  %1406 = vmatpush1.msra.mxu0 %v1281
  %1407 = vmatprep.subr.mxu0 %v1287
  %1408 = vmatpush1.msra.mxu0 %v1286
  %1409 = vmatprep.subr.mxu0 %v1292
  %1410 = vmatpush1.msra.mxu0 %v1291
  %1411 = vmatprep.subr.mxu0 %v1297
  %1412 = vmatpush1.msra.mxu0 %v1296
  %1413 = vmatprep.subr.mxu0 %v1302
  %1414 = vmatpush1.msra.mxu0 %v1301
  %1415 = vmatprep.subr.mxu0 %v1307
  %1416 = vmatpush1.msra.mxu0 %v1306
  %1417 = vmatprep.subr.mxu0 %v1312
  %1418 = vmatpush1.msra.mxu0 %v1311
  %1419 = vmatprep.subr.mxu0 %v1317
  %1420 = vmatpush1.msra.mxu0 %v1316
  %1421 = vmatprep.subr.mxu0 %v1322
  %1422 = vmatpush1.msra.mxu0 %v1321
  %1423 = vmatprep.subr.mxu0 %v1327
  %1424 = vmatpush1.msra.mxu0 %v1326
  %1425 = vmatprep.subr.mxu0 %v1332
  %1426 = vmatpush1.msra.mxu0 %v1331
  %1427 = vmatprep.subr.mxu0 %v1337
  %1428 = vmatpush1.msra.mxu0 %v1336
  %1429 = vmatprep.subr.mxu0 %v1342
  %1430 = vmatpush1.msra.mxu0 %v1341
  %1431 = vmatprep.subr.mxu0 %v1347
  %1432 = vmatpush1.msra.mxu0 %v1346
  %1433 = vmatprep.subr.mxu0 %v1352
  %1434 = vmatpush1.msra.mxu0 %v1351
  %1435 = vmatprep.subr.mxu0 %v1357
  %1436 = vmatpush1.msra.mxu0 %v1356
  %1437 = vmatprep.subr.mxu0 %v1362
  %1438 = vmatpush1.msra.mxu0 %v1361
  %1439 = vmatprep.subr.mxu0 %v1367
  %1440 = vmatpush1.msra.mxu0 %v1366
  %1441 = vmatprep.subr.mxu0 %v1372
  %1442 = vmatpush1.msra.mxu0 %v1371
  %1443 = vmatprep.subr.mxu0 %v1377
  %1444 = vmatpush1.msra.mxu0 %v1376
  %1445 = vmatprep.mubr.f32.mxu0 %v1219
  %1446 = vmatmul.mubr.f32.gmra.mrb[0].mxu0 %v1217
  %v1447 = vpop.f32.mrb[0].mxu0
  %v1448 = vadd.f32 0.0, %v1447
  %v1449 = vpop.f32.mrb[0].mxu0
  %v1450 = vadd.f32 0.0, %v1449
  %1451 = vdwg.mxu0
  %1452 = vmatprep.subr.mxu0 %v1224
  %1453 = vmatpush1.msra.mxu0 %v1223
  %1454 = vmatprep.subr.mxu0 %v1229
  %1455 = vmatpush1.msra.mxu0 %v1228
  %1456 = vmatprep.subr.mxu0 %v1234
  %1457 = vmatpush1.msra.mxu0 %v1233
  %1458 = vmatprep.subr.mxu0 %v1239
  %1459 = vmatpush1.msra.mxu0 %v1238
  %1460 = vmatprep.subr.mxu0 %v1244
  %1461 = vmatpush1.msra.mxu0 %v1243
  %1462 = vmatprep.subr.mxu0 %v1249
  %1463 = vmatpush1.msra.mxu0 %v1248
  %1464 = vmatprep.subr.mxu0 %v1254
  %1465 = vmatpush1.msra.mxu0 %v1253
  %1466 = vmatprep.subr.mxu0 %v1259
  %1467 = vmatpush1.msra.mxu0 %v1258
  %1468 = vmatprep.subr.mxu0 %v1264
  %1469 = vmatpush1.msra.mxu0 %v1263
  %1470 = vmatprep.subr.mxu0 %v1269
  %1471 = vmatpush1.msra.mxu0 %v1268
  %1472 = vmatprep.subr.mxu0 %v1274
  %1473 = vmatpush1.msra.mxu0 %v1273
  %1474 = vmatprep.subr.mxu0 %v1279
  %1475 = vmatpush1.msra.mxu0 %v1278
  %1476 = vmatprep.subr.mxu0 %v1284
  %1477 = vmatpush1.msra.mxu0 %v1283
  %1478 = vmatprep.subr.mxu0 %v1289
  %1479 = vmatpush1.msra.mxu0 %v1288
  %1480 = vmatprep.subr.mxu0 %v1294
  %1481 = vmatpush1.msra.mxu0 %v1293
  %1482 = vmatprep.subr.mxu0 %v1299
  %1483 = vmatpush1.msra.mxu0 %v1298
  %1484 = vmatprep.subr.mxu0 %v1304
  %1485 = vmatpush1.msra.mxu0 %v1303
  %1486 = vmatprep.subr.mxu0 %v1309
  %1487 = vmatpush1.msra.mxu0 %v1308
  %1488 = vmatprep.subr.mxu0 %v1314
  %1489 = vmatpush1.msra.mxu0 %v1313
  %1490 = vmatprep.subr.mxu0 %v1319
  %1491 = vmatpush1.msra.mxu0 %v1318
  %1492 = vmatprep.subr.mxu0 %v1324
  %1493 = vmatpush1.msra.mxu0 %v1323
  %1494 = vmatprep.subr.mxu0 %v1329
  %1495 = vmatpush1.msra.mxu0 %v1328
  %1496 = vmatprep.subr.mxu0 %v1334
  %1497 = vmatpush1.msra.mxu0 %v1333
  %1498 = vmatprep.subr.mxu0 %v1339
  %1499 = vmatpush1.msra.mxu0 %v1338
  %1500 = vmatprep.subr.mxu0 %v1344
  %1501 = vmatpush1.msra.mxu0 %v1343
  %1502 = vmatprep.subr.mxu0 %v1349
  %1503 = vmatpush1.msra.mxu0 %v1348
  %1504 = vmatprep.subr.mxu0 %v1354
  %1505 = vmatpush1.msra.mxu0 %v1353
  %1506 = vmatprep.subr.mxu0 %v1359
  %1507 = vmatpush1.msra.mxu0 %v1358
  %1508 = vmatprep.subr.mxu0 %v1364
  %1509 = vmatpush1.msra.mxu0 %v1363
  %1510 = vmatprep.subr.mxu0 %v1369
  %1511 = vmatpush1.msra.mxu0 %v1368
  %1512 = vmatprep.subr.mxu0 %v1374
  %1513 = vmatpush1.msra.mxu0 %v1373
  %1514 = vmatprep.subr.mxu0 %v1379
  %1515 = vmatpush1.msra.mxu0 %v1378
  %1516 = vmatprep.mubr.f32.mxu0 %v1219
  %1517 = vmatmul.mubr.f32.gmra.mrb[0].mxu0 %v1217
  %v1518 = vpop.f32.mrb[0].mxu0
  %v1519 = vadd.f32 0.0, %v1518
  %v1520 = vpop.f32.mrb[0].mxu0
  %v1521 = vadd.f32 0.0, %v1520
  %1522 = vdwg.mxu0
  %1523 = vmatprep.subr.mxu0 0.0
  %1524 = vmatpush1.msra.mxu0 %v1225
  %1525 = vmatprep.subr.mxu0 0.0
  %1526 = vmatpush1.msra.mxu0 %v1230
  %1527 = vmatprep.subr.mxu0 0.0
  %1528 = vmatpush1.msra.mxu0 %v1235
  %1529 = vmatprep.subr.mxu0 0.0
  %1530 = vmatpush1.msra.mxu0 %v1240
  %1531 = vmatprep.subr.mxu0 0.0
  %1532 = vmatpush1.msra.mxu0 %v1245
  %1533 = vmatprep.subr.mxu0 0.0
  %1534 = vmatpush1.msra.mxu0 %v1250
  %1535 = vmatprep.subr.mxu0 0.0
  %1536 = vmatpush1.msra.mxu0 %v1255
  %1537 = vmatprep.subr.mxu0 0.0
  %1538 = vmatpush1.msra.mxu0 %v1260
  %1539 = vmatprep.subr.mxu0 0.0
  %1540 = vmatpush1.msra.mxu0 %v1265
  %1541 = vmatprep.subr.mxu0 0.0
  %1542 = vmatpush1.msra.mxu0 %v1270
  %1543 = vmatprep.subr.mxu0 0.0
  %1544 = vmatpush1.msra.mxu0 %v1275
  %1545 = vmatprep.subr.mxu0 0.0
  %1546 = vmatpush1.msra.mxu0 %v1280
  %1547 = vmatprep.subr.mxu0 0.0
  %1548 = vmatpush1.msra.mxu0 %v1285
  %1549 = vmatprep.subr.mxu0 0.0
  %1550 = vmatpush1.msra.mxu0 %v1290
  %1551 = vmatprep.subr.mxu0 0.0
  %1552 = vmatpush1.msra.mxu0 %v1295
  %1553 = vmatprep.subr.mxu0 0.0
  %1554 = vmatpush1.msra.mxu0 %v1300
  %1555 = vmatprep.subr.mxu0 0.0
  %1556 = vmatpush1.msra.mxu0 %v1305
  %1557 = vmatprep.subr.mxu0 0.0
  %1558 = vmatpush1.msra.mxu0 %v1310
  %1559 = vmatprep.subr.mxu0 0.0
  %1560 = vmatpush1.msra.mxu0 %v1315
  %1561 = vmatprep.subr.mxu0 0.0
  %1562 = vmatpush1.msra.mxu0 %v1320
  %1563 = vmatprep.subr.mxu0 0.0
  %1564 = vmatpush1.msra.mxu0 %v1325
  %1565 = vmatprep.subr.mxu0 0.0
  %1566 = vmatpush1.msra.mxu0 %v1330
  %1567 = vmatprep.subr.mxu0 0.0
  %1568 = vmatpush1.msra.mxu0 %v1335
  %1569 = vmatprep.subr.mxu0 0.0
  %1570 = vmatpush1.msra.mxu0 %v1340
  %1571 = vmatprep.subr.mxu0 0.0
  %1572 = vmatpush1.msra.mxu0 %v1345
  %1573 = vmatprep.subr.mxu0 0.0
  %1574 = vmatpush1.msra.mxu0 %v1350
  %1575 = vmatprep.subr.mxu0 0.0
  %1576 = vmatpush1.msra.mxu0 %v1355
  %1577 = vmatprep.subr.mxu0 0.0
  %1578 = vmatpush1.msra.mxu0 %v1360
  %1579 = vmatprep.subr.mxu0 0.0
  %1580 = vmatpush1.msra.mxu0 %v1365
  %1581 = vmatprep.subr.mxu0 0.0
  %1582 = vmatpush1.msra.mxu0 %v1370
  %1583 = vmatprep.subr.mxu0 0.0
  %1584 = vmatpush1.msra.mxu0 %v1375
  %1585 = vmatprep.subr.mxu0 0.0
  %1586 = vmatpush1.msra.mxu0 %v1380
  %1587 = vmatprep.mubr.f32.mxu0 %v1219
  %1588 = vmatmul.mubr.f32.gmra.mrb[0].mxu0 %v1217
  %v1589 = vpop.f32.mrb[0].mxu0
  %v1590 = vadd.f32 0.0, %v1589
  %v1591 = vpop.f32.mrb[0].mxu0
  %1592 = vdwg.mxu0
  %vm1593 = vcmp.gt.f32.partialorder %v1448, 0.5
  %vm1594 = vcmp.gt.f32.partialorder %v1450, 0.5
  %vm1595 = vcmp.gt.f32.partialorder %v1519, 0.5
  %vm1596 = vcmp.gt.f32.partialorder %v1521, 0.5
  %vm1597 = vcmp.gt.f32.partialorder %v1590, 0.5
  %v1598 = vsel %vm1593, 1, 0
  %v1599 = vsel %vm1594, 1, 0
  %v1600 = vsel %vm1595, 1, 0
  %v1601 = vsel %vm1596, 1, 0
  %v1602 = vsel %vm1597, 1, 0
  %v1603 = vcvt.s32.f32 %v1598
  %v1604 = vcvt.s32.f32 %v1599
  %v1605 = vcvt.s32.f32 %v1600
  %v1606 = vcvt.s32.f32 %v1601
  %v1607 = vcvt.s32.f32 %v1602
  %v1613 = vcombine.low %v1603, %v1604
  %v1614 = vcombine.low %v1605, %v1606
  %v1616 = vunpack.c.l.s4 1983009808
  %v1617 = vunpack.c.0.s8 %v1616
  %v1618 = vlaneseq
  %v1619 = vshrl.u32 %v1618, 7
  %v1620 = vsub.s32 %v1617, %v1619
  %v1621 = vrot.slane %v1613, %v1620
  %v1623 = vunpack.c.l.s4 1983009808
  %v1624 = vunpack.c.0.s8 %v1623
  %v1625 = vlaneseq
  %v1626 = vshrl.u32 %v1625, 7
  %v1627 = vsub.s32 %v1624, %v1626
  %v1628 = vrot.slane %v1614, %v1627
  %v1629 = vcombine.low %v1621, %v1628
  %v1631 = vunpack.c.l.s4 1983009808
  %v1632 = vunpack.c.0.s8 %v1631
  %v1633 = vlaneseq
  %v1634 = vshrl.u32 %v1633, 7
  %v1635 = vsub.s32 %v1632, %v1634
  %v1636 = vrot.slane %v1607, %v1635
  %1639 = vst [vmem:[%s4] sm:$0xff] %v1629
  %1640 = vst [vmem:[%s4 + $0x8] sm:$0x3] %v1636
  // Predicated region
  $region18: #{medsam_forward.1} parent=0 // pred_check
    _
  $region19: #{medsam_forward.1} parent=0 // pred_check_branch
    %1642 = sbr.rel (0) target = $region21
  $region20: #{medsam_forward.1} parent=0 // pred_region
    _
  $region21: #{medsam_forward.1} parent=0 // pred_fallthru
    _
  // Predicated region
  $region22: #{medsam_forward.1} parent=0 // pred_check
    _
  $region23: #{medsam_forward.1} parent=0 // pred_check_branch
    %1644 = sbr.rel (0) target = $region25
  $region24: #{medsam_forward.1} parent=0 // pred_region
    _
  $region25: #{medsam_forward.1} parent=0 // pred_fallthru
    _

</llo_original>
